<compile_context>
chip_gen: v7x
topology: tpu7x:2x2x1
jax: 0.10.0
libtpu: 0.0.40
codegen_flags: <defaults>
</compile_context>

<pallas_src>
import math
import functools

import jax
import jax.numpy as jnp
from jax.experimental import pallas as pl
from jax.experimental.pallas import tpu as pltpu


def _mha_kernel(q_ref, k_ref, v_ref, m_ref,
                wqkv_ref, bqkv_ref, wo_ref, bo_ref,
                o_ref, *, n_heads, head_dim, attn_dtype):
    bt, S, D = q_ref.shape
    H, hd = n_heads, head_dim
    M = bt * S
    scale = 1.0 / math.sqrt(hd)

    # ---- projections on (bt*S, D) rows; weights already transposed to (in,out) ----
    xq = q_ref[...].reshape(M, D)
    xk = k_ref[...].reshape(M, D)
    xv = v_ref[...].reshape(M, D)

    q = (jnp.dot(xq, wqkv_ref[0], preferred_element_type=jnp.float32)
         + bqkv_ref[0]) * scale                       # fold 1/sqrt(hd) into q once
    k = jnp.dot(xk, wqkv_ref[1], preferred_element_type=jnp.float32) + bqkv_ref[1]
    v = jnp.dot(xv, wqkv_ref[2], preferred_element_type=jnp.float32) + bqkv_ref[2]

    # ---- head-major (bt*H, S, hd) built with lane slices + leading-axis stack ----
    def to_heads(x):
        x3 = x.reshape(bt, S, D)
        parts = [x3[:, :, h * hd:(h + 1) * hd] for h in range(H)]
        return jnp.stack(parts, axis=1).reshape(bt * H, S, hd)

    qh = to_heads(q).astype(attn_dtype)
    kh = to_heads(k).astype(attn_dtype)
    vh = to_heads(v).astype(attn_dtype)

    # ---- scores: batched contraction on last dims (no K transpose), f32 accum ----
    scores = jnp.einsum('bqd,bkd->bqk', qh, kh,
                        preferred_element_type=jnp.float32)       # (bt*H, S, S)

    # ---- mask + numerically stable softmax, kept in f32 ----
    scores4 = scores.reshape(bt, H, S, S)
    keep = m_ref[...] != 0                                        # (bt, S, S) bool
    scores4 = jnp.where(keep[:, None, :, :], scores4, jnp.float32(-1e9))
    row_max = jnp.max(scores4, axis=-1, keepdims=True)
    p = jnp.exp(scores4 - row_max)
    denom = jnp.sum(p, axis=-1, keepdims=True)
    probs = p * pl.reciprocal(denom, approx=True)                 # EUP, not VALU div

    # ---- PV: batched contraction ----
    ctx = jnp.einsum('bqk,bkd->bqd',
                     probs.reshape(bt * H, S, S).astype(attn_dtype), vh,
                     preferred_element_type=jnp.float32)          # (bt*H, S, hd)

    # ---- output projection: per-head accumulation against sublane slices of
    #      Wo^T (no lane-dim concatenate of head outputs) ----
    ctx4 = ctx.reshape(bt, H, S, hd)
    wo_t = wo_ref[...]                                            # (D, D), pre-transposed
    out = jnp.zeros((M, D), jnp.float32)
    for h in range(H):
        out = out + jnp.dot(ctx4[:, h].reshape(M, hd),
                            wo_t[h * hd:(h + 1) * hd, :],
                            preferred_element_type=jnp.float32)
    out = out + bo_ref[...]
    o_ref[...] = out.reshape(bt, S, D).astype(o_ref.dtype)


def multi_head_attention(query, key, value, mask, params, *, n_heads,
                         batch_tile=None, attn_matmul_dtype=jnp.float32):
    bs, seq_len, d_model = query.shape
    head_dim = d_model // n_heads
    assert head_dim * n_heads == d_model

    if batch_tile is None:
        batch_tile = bs
    assert bs % batch_tile == 0
    grid = (bs // batch_tile,)

    wq, bq, wk, bk, wv, bv, wo, bo = params

    # One-time trace-level layout prep (zero in-kernel cost):
    #   weights transposed to (in, out); Q/K/V weights stacked into one operand.
    wqkv_t = jnp.stack([wq.T, wk.T, wv.T], axis=0)                     # (3, D, D)
    bqkv = jnp.stack([bq.reshape(1, d_model),
                      bk.reshape(1, d_model),
                      bv.reshape(1, d_model)], axis=0)                 # (3, 1, D)
    wo_t = wo.T                                                        # (D, D)
    bo2 = bo.reshape(1, d_model)                                       # (1, D)

    # int8 mask: 4x less HBM/VMEM than f32 (semantics: 0 => masked with -1e9).
    mask_i8 = (mask != 0).astype(jnp.int8)

    kernel = functools.partial(_mha_kernel, n_heads=n_heads, head_dim=head_dim,
                               attn_dtype=attn_matmul_dtype)

    x_spec = pl.BlockSpec((batch_tile, seq_len, d_model), lambda b: (b, 0, 0))
    mask_spec = pl.BlockSpec((batch_tile, seq_len, seq_len), lambda b: (b, 0, 0))
    wqkv_spec = pl.BlockSpec((3, d_model, d_model), lambda b: (0, 0, 0))
    bqkv_spec = pl.BlockSpec((3, 1, d_model), lambda b: (0, 0, 0))
    wo_spec = pl.BlockSpec((d_model, d_model), lambda b: (0, 0))
    bo_spec = pl.BlockSpec((1, d_model), lambda b: (0, 0))

    return pl.pallas_call(
        kernel,
        out_shape=jax.ShapeDtypeStruct((bs, seq_len, d_model), query.dtype),
        grid_spec=pltpu.PrefetchScalarGridSpec(
            num_scalar_prefetch=0,
            grid=grid,
            in_specs=[x_spec, x_spec, x_spec, mask_spec,
                      wqkv_spec, bqkv_spec, wo_spec, bo_spec],
            out_specs=x_spec,
        ),
        compiler_params=pltpu.CompilerParams(
            dimension_semantics=("parallel",),
            vmem_limit_bytes=48 * 1024 * 1024),
    )(query, key, value, mask_i8, wqkv_t, bqkv, wo_t, bo2)


def _init_linear(key, d_in, d_out):
    # Deterministic init mimicking PyTorch nn.Linear default (uniform +-1/sqrt(fan_in)).
    kw, kb = jax.random.split(key)
    bound = 1.0 / math.sqrt(d_in)
    w = jax.random.uniform(kw, (d_out, d_in), jnp.float32, -bound, bound)
    b = jax.random.uniform(kb, (1, d_out), jnp.float32, -bound, bound)
    return w, b


def _reference(query, key, value, mask, params, n_heads):
    # Pure-JAX reference replicating the PyTorch forward exactly.
    wq, bq, wk, bk, wv, bv, wo, bo = params
    bs, S, D = query.shape
    hd = D // n_heads

    def proj(x, w, b):
        return x @ w.T + b[0]

    def split_heads(x):
        return x.reshape(bs, S, n_heads, hd).transpose(0, 2, 1, 3)  # (bs, H, S, hd)

    q = split_heads(proj(query, wq, bq))
    k = split_heads(proj(key, wk, bk))
    v = split_heads(proj(value, wv, bv))
    scores = jnp.einsum('bhqd,bhkd->bhqk', q, k) / math.sqrt(hd)
    scores = jnp.where(mask[:, None, :, :] == 0, -1e9, scores)
    attn = jax.nn.softmax(scores, axis=-1)
    out = jnp.einsum('bhqk,bhkd->bhqd', attn, v)
    out = out.transpose(0, 2, 1, 3).reshape(bs, S, D)
    return out @ wo.T + bo[0]


if __name__ == "__main__":
    bs, seq_len, d_model, n_heads = 2, 8, 32, 4

    root = jax.random.PRNGKey(0)
    kq, kk, kv, km, k1, k2, k3, k4 = jax.random.split(root, 8)

    query = jax.random.normal(kq, (bs, seq_len, d_model), jnp.float32)
    key = jax.random.normal(kk, (bs, seq_len, d_model), jnp.float32)
    value = jax.random.normal(kv, (bs, seq_len, d_model), jnp.float32)
    # binary mask (0 -> masked out), as in masked_fill(mask == 0, -1e9)
    mask = (jax.random.uniform(km, (bs, seq_len, seq_len)) > 0.2).astype(jnp.float32)

    params = (*_init_linear(k1, d_model, d_model),
              *_init_linear(k2, d_model, d_model),
              *_init_linear(k3, d_model, d_model),
              *_init_linear(k4, d_model, d_model))

    ref = _reference(query, key, value, mask, params, n_heads)

    # f32 MXU operands everywhere (tolerance covers the approx EUP reciprocal
    # used in the softmax normalization).
    out_f32 = multi_head_attention(query, key, value, mask, params, n_heads=n_heads)
    out_f32 = jax.block_until_ready(out_f32)
    assert out_f32.shape == (bs, seq_len, d_model)
    assert jnp.allclose(out_f32, ref, atol=5e-3, rtol=5e-3), "f32 kernel mismatch vs reference"

    # bf16 MXU operands for the attention matmuls (v6e/v7x MXU rate); softmax
    # and accumulation stay f32, so only a small extra tolerance is needed.
    out_bf16 = multi_head_attention(query, key, value, mask, params, n_heads=n_heads,
                                    attn_matmul_dtype=jnp.bfloat16)
    out_bf16 = jax.block_until_ready(out_bf16)
    assert jnp.allclose(out_bf16, ref, atol=3e-2, rtol=3e-2), "bf16 kernel mismatch vs reference"

    print("KERNEL_OK")
</pallas_src>

<mosaic_0001>
module attributes {stable_mosaic.version = 11 : i64} {
  func.func @_mha_kernel(%arg0: i32, %arg1: memref<2x8x32xf32, #tpu.memory_space<vmem>>, %arg2: memref<2x8x32xf32, #tpu.memory_space<vmem>>, %arg3: memref<2x8x32xf32, #tpu.memory_space<vmem>>, %arg4: memref<2x8x8xi8, #tpu.memory_space<vmem>>, %arg5: memref<3x32x32xf32, #tpu.memory_space<vmem>>, %arg6: memref<3x1x32xf32, #tpu.memory_space<vmem>>, %arg7: memref<32x32xf32, #tpu.memory_space<vmem>>, %arg8: memref<1x32xf32, #tpu.memory_space<vmem>>, %arg9: memref<2x8x32xf32, #tpu.memory_space<vmem>>) attributes {dimension_semantics = [#tpu.dimension_semantics<parallel>], iteration_bounds = array<i64: 1>, scalar_prefetch = 0 : i64, scratch_operands = 0 : i64, tpu.core_type = #tpu.core_type<tc>, window_params = [{transform_indices = @transform_0, window_bounds = array<i64: 2, 8, 32>}, {transform_indices = @transform_1, window_bounds = array<i64: 2, 8, 32>}, {transform_indices = @transform_2, window_bounds = array<i64: 2, 8, 32>}, {transform_indices = @transform_3, window_bounds = array<i64: 2, 8, 8>}, {pipeline_mode = #tpu.pipeline_mode<synchronous>, transform_indices = @transform_4, window_bounds = array<i64: 3, 32, 32>}, {pipeline_mode = #tpu.pipeline_mode<synchronous>, transform_indices = @transform_5, window_bounds = array<i64: 3, 1, 32>}, {pipeline_mode = #tpu.pipeline_mode<synchronous>, transform_indices = @transform_6, window_bounds = array<i64: 32, 32>}, {pipeline_mode = #tpu.pipeline_mode<synchronous>, transform_indices = @transform_7, window_bounds = array<i64: 1, 32>}, {transform_indices = @transform_8, window_bounds = array<i64: 2, 8, 32>}]} {
    %c0 = arith.constant 0 : index
    %c0_0 = arith.constant 0 : index
    %c0_1 = arith.constant 0 : index
    %0 = vector.load %arg1[%c0, %c0_0, %c0_1] : memref<2x8x32xf32, #tpu.memory_space<vmem>>, vector<2x8x32xf32>
    %1 = vector.shape_cast %0 : vector<2x8x32xf32> to vector<16x32xf32>
    %c0_2 = arith.constant 0 : index
    %c0_3 = arith.constant 0 : index
    %c0_4 = arith.constant 0 : index
    %2 = vector.load %arg2[%c0_2, %c0_3, %c0_4] : memref<2x8x32xf32, #tpu.memory_space<vmem>>, vector<2x8x32xf32>
    %3 = vector.shape_cast %2 : vector<2x8x32xf32> to vector<16x32xf32>
    %c0_5 = arith.constant 0 : index
    %c0_6 = arith.constant 0 : index
    %c0_7 = arith.constant 0 : index
    %4 = vector.load %arg3[%c0_5, %c0_6, %c0_7] : memref<2x8x32xf32, #tpu.memory_space<vmem>>, vector<2x8x32xf32>
    %5 = vector.shape_cast %4 : vector<2x8x32xf32> to vector<16x32xf32>
    %c0_8 = arith.constant 0 : index
    %c0_9 = arith.constant 0 : index
    %c0_10 = arith.constant 0 : index
    %6 = vector.load %arg5[%c0_8, %c0_9, %c0_10] : memref<3x32x32xf32, #tpu.memory_space<vmem>>, vector<1x32x32xf32>
    %7 = vector.shape_cast %6 : vector<1x32x32xf32> to vector<32x32xf32>
    %cst = arith.constant dense<0.000000e+00> : vector<16x32xf32>
    %8 = tpu.matmul %1, %7, %cst {dimension_numbers = #tpu.dot_dimension_numbers<[1], [0], [0], [1], [0, 0, 1, 1], [], []>} : vector<16x32xf32>, vector<32x32xf32>, vector<16x32xf32> -> vector<16x32xf32>
    %c0_11 = arith.constant 0 : index
    %c0_12 = arith.constant 0 : index
    %c0_13 = arith.constant 0 : index
    %9 = vector.load %arg6[%c0_11, %c0_12, %c0_13] : memref<3x1x32xf32, #tpu.memory_space<vmem>>, vector<1x1x32xf32>
    %10 = vector.shape_cast %9 : vector<1x1x32xf32> to vector<1x32xf32>
    %11 = vector.broadcast %10 : vector<1x32xf32> to vector<16x32xf32>
    %12 = arith.addf %8, %11 : vector<16x32xf32>
    %cst_14 = arith.constant 0.353553385 : f32
    %13 = vector.broadcast %cst_14 : f32 to vector<16x32xf32>
    %14 = arith.mulf %12, %13 : vector<16x32xf32>
    %c1 = arith.constant 1 : index
    %c0_15 = arith.constant 0 : index
    %c0_16 = arith.constant 0 : index
    %15 = vector.load %arg5[%c1, %c0_15, %c0_16] : memref<3x32x32xf32, #tpu.memory_space<vmem>>, vector<1x32x32xf32>
    %16 = vector.shape_cast %15 : vector<1x32x32xf32> to vector<32x32xf32>
    %cst_17 = arith.constant dense<0.000000e+00> : vector<16x32xf32>
    %17 = tpu.matmul %3, %16, %cst_17 {dimension_numbers = #tpu.dot_dimension_numbers<[1], [0], [0], [1], [0, 0, 1, 1], [], []>} : vector<16x32xf32>, vector<32x32xf32>, vector<16x32xf32> -> vector<16x32xf32>
    %c1_18 = arith.constant 1 : index
    %c0_19 = arith.constant 0 : index
    %c0_20 = arith.constant 0 : index
    %18 = vector.load %arg6[%c1_18, %c0_19, %c0_20] : memref<3x1x32xf32, #tpu.memory_space<vmem>>, vector<1x1x32xf32>
    %19 = vector.shape_cast %18 : vector<1x1x32xf32> to vector<1x32xf32>
    %20 = vector.broadcast %19 : vector<1x32xf32> to vector<16x32xf32>
    %21 = arith.addf %17, %20 : vector<16x32xf32>
    %c2 = arith.constant 2 : index
    %c0_21 = arith.constant 0 : index
    %c0_22 = arith.constant 0 : index
    %22 = vector.load %arg5[%c2, %c0_21, %c0_22] : memref<3x32x32xf32, #tpu.memory_space<vmem>>, vector<1x32x32xf32>
    %23 = vector.shape_cast %22 : vector<1x32x32xf32> to vector<32x32xf32>
    %cst_23 = arith.constant dense<0.000000e+00> : vector<16x32xf32>
    %24 = tpu.matmul %5, %23, %cst_23 {dimension_numbers = #tpu.dot_dimension_numbers<[1], [0], [0], [1], [0, 0, 1, 1], [], []>} : vector<16x32xf32>, vector<32x32xf32>, vector<16x32xf32> -> vector<16x32xf32>
    %c2_24 = arith.constant 2 : index
    %c0_25 = arith.constant 0 : index
    %c0_26 = arith.constant 0 : index
    %25 = vector.load %arg6[%c2_24, %c0_25, %c0_26] : memref<3x1x32xf32, #tpu.memory_space<vmem>>, vector<1x1x32xf32>
    %26 = vector.shape_cast %25 : vector<1x1x32xf32> to vector<1x32xf32>
    %27 = vector.broadcast %26 : vector<1x32xf32> to vector<16x32xf32>
    %28 = arith.addf %24, %27 : vector<16x32xf32>
    %29 = vector.shape_cast %14 : vector<16x32xf32> to vector<2x8x32xf32>
    %30 = vector.extract_strided_slice %29 {offsets = [0, 0, 0], sizes = [2, 8, 8], strides = [1, 1, 1]} : vector<2x8x32xf32> to vector<2x8x8xf32>
    %31 = vector.extract_strided_slice %29 {offsets = [0, 0, 8], sizes = [2, 8, 8], strides = [1, 1, 1]} : vector<2x8x32xf32> to vector<2x8x8xf32>
    %32 = vector.extract_strided_slice %29 {offsets = [0, 0, 16], sizes = [2, 8, 8], strides = [1, 1, 1]} : vector<2x8x32xf32> to vector<2x8x8xf32>
    %33 = vector.extract_strided_slice %29 {offsets = [0, 0, 24], sizes = [2, 8, 8], strides = [1, 1, 1]} : vector<2x8x32xf32> to vector<2x8x8xf32>
    %34 = vector.shape_cast %30 : vector<2x8x8xf32> to vector<2x1x8x8xf32>
    %35 = vector.shape_cast %31 : vector<2x8x8xf32> to vector<2x1x8x8xf32>
    %36 = vector.shape_cast %32 : vector<2x8x8xf32> to vector<2x1x8x8xf32>
    %37 = vector.shape_cast %33 : vector<2x8x8xf32> to vector<2x1x8x8xf32>
    %38 = tpu.concatenate %34, %35, %36, %37 in 1 : vector<2x1x8x8xf32>, vector<2x1x8x8xf32>, vector<2x1x8x8xf32>, vector<2x1x8x8xf32> -> vector<2x4x8x8xf32>
    %39 = vector.shape_cast %38 : vector<2x4x8x8xf32> to vector<8x8x8xf32>
    %40 = vector.shape_cast %21 : vector<16x32xf32> to vector<2x8x32xf32>
    %41 = vector.extract_strided_slice %40 {offsets = [0, 0, 0], sizes = [2, 8, 8], strides = [1, 1, 1]} : vector<2x8x32xf32> to vector<2x8x8xf32>
    %42 = vector.extract_strided_slice %40 {offsets = [0, 0, 8], sizes = [2, 8, 8], strides = [1, 1, 1]} : vector<2x8x32xf32> to vector<2x8x8xf32>
    %43 = vector.extract_strided_slice %40 {offsets = [0, 0, 16], sizes = [2, 8, 8], strides = [1, 1, 1]} : vector<2x8x32xf32> to vector<2x8x8xf32>
    %44 = vector.extract_strided_slice %40 {offsets = [0, 0, 24], sizes = [2, 8, 8], strides = [1, 1, 1]} : vector<2x8x32xf32> to vector<2x8x8xf32>
    %45 = vector.shape_cast %41 : vector<2x8x8xf32> to vector<2x1x8x8xf32>
    %46 = vector.shape_cast %42 : vector<2x8x8xf32> to vector<2x1x8x8xf32>
    %47 = vector.shape_cast %43 : vector<2x8x8xf32> to vector<2x1x8x8xf32>
    %48 = vector.shape_cast %44 : vector<2x8x8xf32> to vector<2x1x8x8xf32>
    %49 = tpu.concatenate %45, %46, %47, %48 in 1 : vector<2x1x8x8xf32>, vector<2x1x8x8xf32>, vector<2x1x8x8xf32>, vector<2x1x8x8xf32> -> vector<2x4x8x8xf32>
    %50 = vector.shape_cast %49 : vector<2x4x8x8xf32> to vector<8x8x8xf32>
    %51 = vector.shape_cast %28 : vector<16x32xf32> to vector<2x8x32xf32>
    %52 = vector.extract_strided_slice %51 {offsets = [0, 0, 0], sizes = [2, 8, 8], strides = [1, 1, 1]} : vector<2x8x32xf32> to vector<2x8x8xf32>
    %53 = vector.extract_strided_slice %51 {offsets = [0, 0, 8], sizes = [2, 8, 8], strides = [1, 1, 1]} : vector<2x8x32xf32> to vector<2x8x8xf32>
    %54 = vector.extract_strided_slice %51 {offsets = [0, 0, 16], sizes = [2, 8, 8], strides = [1, 1, 1]} : vector<2x8x32xf32> to vector<2x8x8xf32>
    %55 = vector.extract_strided_slice %51 {offsets = [0, 0, 24], sizes = [2, 8, 8], strides = [1, 1, 1]} : vector<2x8x32xf32> to vector<2x8x8xf32>
    %56 = vector.shape_cast %52 : vector<2x8x8xf32> to vector<2x1x8x8xf32>
    %57 = vector.shape_cast %53 : vector<2x8x8xf32> to vector<2x1x8x8xf32>
    %58 = vector.shape_cast %54 : vector<2x8x8xf32> to vector<2x1x8x8xf32>
    %59 = vector.shape_cast %55 : vector<2x8x8xf32> to vector<2x1x8x8xf32>
    %60 = tpu.concatenate %56, %57, %58, %59 in 1 : vector<2x1x8x8xf32>, vector<2x1x8x8xf32>, vector<2x1x8x8xf32>, vector<2x1x8x8xf32> -> vector<2x4x8x8xf32>
    %61 = vector.shape_cast %60 : vector<2x4x8x8xf32> to vector<8x8x8xf32>
    "tpu.trace_start"() <{level = 10 : i32, message = "bqd,bkd->bqk"}> : () -> ()
    %cst_27 = arith.constant dense<0.000000e+00> : vector<8x8x8xf32>
    %62 = tpu.matmul %39, %50, %cst_27 {dimension_numbers = #tpu.dot_dimension_numbers<[2], [2], [1], [1], [0, 0, 0, 1, 1, 1], [0], [0]>} : vector<8x8x8xf32>, vector<8x8x8xf32>, vector<8x8x8xf32> -> vector<8x8x8xf32>
    "tpu.trace_stop"() : () -> ()
    %63 = vector.shape_cast %62 : vector<8x8x8xf32> to vector<2x4x8x8xf32>
    %c0_28 = arith.constant 0 : index
    %c0_29 = arith.constant 0 : index
    %c0_30 = arith.constant 0 : index
    %64 = vector.load %arg4[%c0_28, %c0_29, %c0_30] : memref<2x8x8xi8, #tpu.memory_space<vmem>>, vector<2x8x8xi8>
    %c0_i8 = arith.constant 0 : i8
    %65 = vector.broadcast %c0_i8 : i8 to vector<2x8x8xi8>
    %66 = arith.cmpi ne, %64, %65 : vector<2x8x8xi8>
    %67 = vector.shape_cast %66 : vector<2x8x8xi1> to vector<2x1x8x8xi1>
    %cst_31 = arith.constant -1.000000e+09 : f32
    %68 = vector.shape_cast %67 : vector<2x1x8x8xi1> to vector<2x1x8x8xi1>
    %69 = vector.broadcast %68 : vector<2x1x8x8xi1> to vector<2x4x8x8xi1>
    %70 = vector.broadcast %cst_31 : f32 to vector<2x4x8x8xf32>
    %71 = arith.select %69, %63, %70 : vector<2x4x8x8xi1>, vector<2x4x8x8xf32>
    %cst_32 = arith.constant dense<0xFF800000> : vector<2x4x8xf32>
    %72 = vector.multi_reduction <maximumf>, %71, %cst_32 [3] : vector<2x4x8x8xf32> to vector<2x4x8xf32>
    %73 = vector.shape_cast %72 : vector<2x4x8xf32> to vector<2x4x8x1xf32>
    %74 = vector.broadcast %73 : vector<2x4x8x1xf32> to vector<2x4x8x8xf32>
    %75 = arith.subf %71, %74 : vector<2x4x8x8xf32>
    %76 = math.exp %75 : vector<2x4x8x8xf32>
    %cst_33 = arith.constant dense<0.000000e+00> : vector<2x4x8xf32>
    %77 = vector.multi_reduction <add>, %76, %cst_33 [3] : vector<2x4x8x8xf32> to vector<2x4x8xf32>
    %78 = vector.shape_cast %77 : vector<2x4x8xf32> to vector<2x4x8x1xf32>
    %79 = tpu.reciprocal %78 {approx = true} : vector<2x4x8x1xf32> -> vector<2x4x8x1xf32>
    %80 = vector.broadcast %79 : vector<2x4x8x1xf32> to vector<2x4x8x8xf32>
    %81 = arith.mulf %76, %80 : vector<2x4x8x8xf32>
    %82 = vector.shape_cast %81 : vector<2x4x8x8xf32> to vector<8x8x8xf32>
    "tpu.trace_start"() <{level = 10 : i32, message = "bqk,bkd->bqd"}> : () -> ()
    %cst_34 = arith.constant dense<0.000000e+00> : vector<8x8x8xf32>
    %83 = tpu.matmul %82, %61, %cst_34 {dimension_numbers = #tpu.dot_dimension_numbers<[2], [1], [1], [2], [0, 0, 0, 1, 1, 2], [0], [0]>} : vector<8x8x8xf32>, vector<8x8x8xf32>, vector<8x8x8xf32> -> vector<8x8x8xf32>
    "tpu.trace_stop"() : () -> ()
    %84 = vector.shape_cast %83 : vector<8x8x8xf32> to vector<2x4x8x8xf32>
    %c0_35 = arith.constant 0 : index
    %c0_36 = arith.constant 0 : index
    %85 = vector.load %arg7[%c0_35, %c0_36] : memref<32x32xf32, #tpu.memory_space<vmem>>, vector<32x32xf32>
    %cst_37 = arith.constant 0.000000e+00 : f32
    %86 = vector.broadcast %cst_37 : f32 to vector<16x32xf32>
    %87 = vector.extract_strided_slice %84 {offsets = [0, 0, 0, 0], sizes = [2, 1, 8, 8], strides = [1, 1, 1, 1]} : vector<2x4x8x8xf32> to vector<2x1x8x8xf32>
    %88 = vector.shape_cast %87 : vector<2x1x8x8xf32> to vector<2x8x8xf32>
    %89 = vector.shape_cast %88 : vector<2x8x8xf32> to vector<16x8xf32>
    %90 = vector.extract_strided_slice %85 {offsets = [0, 0], sizes = [8, 32], strides = [1, 1]} : vector<32x32xf32> to vector<8x32xf32>
    %cst_38 = arith.constant dense<0.000000e+00> : vector<16x32xf32>
    %91 = tpu.matmul %89, %90, %cst_38 {dimension_numbers = #tpu.dot_dimension_numbers<[1], [0], [0], [1], [0, 0, 1, 1], [], []>} : vector<16x8xf32>, vector<8x32xf32>, vector<16x32xf32> -> vector<16x32xf32>
    %92 = arith.addf %86, %91 : vector<16x32xf32>
    %93 = vector.extract_strided_slice %84 {offsets = [0, 1, 0, 0], sizes = [2, 1, 8, 8], strides = [1, 1, 1, 1]} : vector<2x4x8x8xf32> to vector<2x1x8x8xf32>
    %94 = vector.shape_cast %93 : vector<2x1x8x8xf32> to vector<2x8x8xf32>
    %95 = vector.shape_cast %94 : vector<2x8x8xf32> to vector<16x8xf32>
    %96 = vector.extract_strided_slice %85 {offsets = [8, 0], sizes = [8, 32], strides = [1, 1]} : vector<32x32xf32> to vector<8x32xf32>
    %cst_39 = arith.constant dense<0.000000e+00> : vector<16x32xf32>
    %97 = tpu.matmul %95, %96, %cst_39 {dimension_numbers = #tpu.dot_dimension_numbers<[1], [0], [0], [1], [0, 0, 1, 1], [], []>} : vector<16x8xf32>, vector<8x32xf32>, vector<16x32xf32> -> vector<16x32xf32>
    %98 = arith.addf %92, %97 : vector<16x32xf32>
    %99 = vector.extract_strided_slice %84 {offsets = [0, 2, 0, 0], sizes = [2, 1, 8, 8], strides = [1, 1, 1, 1]} : vector<2x4x8x8xf32> to vector<2x1x8x8xf32>
    %100 = vector.shape_cast %99 : vector<2x1x8x8xf32> to vector<2x8x8xf32>
    %101 = vector.shape_cast %100 : vector<2x8x8xf32> to vector<16x8xf32>
    %102 = vector.extract_strided_slice %85 {offsets = [16, 0], sizes = [8, 32], strides = [1, 1]} : vector<32x32xf32> to vector<8x32xf32>
    %cst_40 = arith.constant dense<0.000000e+00> : vector<16x32xf32>
    %103 = tpu.matmul %101, %102, %cst_40 {dimension_numbers = #tpu.dot_dimension_numbers<[1], [0], [0], [1], [0, 0, 1, 1], [], []>} : vector<16x8xf32>, vector<8x32xf32>, vector<16x32xf32> -> vector<16x32xf32>
    %104 = arith.addf %98, %103 : vector<16x32xf32>
    %105 = vector.extract_strided_slice %84 {offsets = [0, 3, 0, 0], sizes = [2, 1, 8, 8], strides = [1, 1, 1, 1]} : vector<2x4x8x8xf32> to vector<2x1x8x8xf32>
    %106 = vector.shape_cast %105 : vector<2x1x8x8xf32> to vector<2x8x8xf32>
    %107 = vector.shape_cast %106 : vector<2x8x8xf32> to vector<16x8xf32>
    %108 = vector.extract_strided_slice %85 {offsets = [24, 0], sizes = [8, 32], strides = [1, 1]} : vector<32x32xf32> to vector<8x32xf32>
    %cst_41 = arith.constant dense<0.000000e+00> : vector<16x32xf32>
    %109 = tpu.matmul %107, %108, %cst_41 {dimension_numbers = #tpu.dot_dimension_numbers<[1], [0], [0], [1], [0, 0, 1, 1], [], []>} : vector<16x8xf32>, vector<8x32xf32>, vector<16x32xf32> -> vector<16x32xf32>
    %110 = arith.addf %104, %109 : vector<16x32xf32>
    %c0_42 = arith.constant 0 : index
    %c0_43 = arith.constant 0 : index
    %111 = vector.load %arg8[%c0_42, %c0_43] : memref<1x32xf32, #tpu.memory_space<vmem>>, vector<1x32xf32>
    %112 = vector.broadcast %111 : vector<1x32xf32> to vector<16x32xf32>
    %113 = arith.addf %110, %112 : vector<16x32xf32>
    %114 = vector.shape_cast %113 : vector<16x32xf32> to vector<2x8x32xf32>
    %c0_44 = arith.constant 0 : index
    %c0_45 = arith.constant 0 : index
    %c0_46 = arith.constant 0 : index
    %115 = vector.load %arg9[%c0_44, %c0_45, %c0_46] : memref<2x8x32xf32, #tpu.memory_space<vmem>>, vector<2x8x32xf32>
    tpu.vector_store %arg9[%c0_44, %c0_45, %c0_46], %114 {strides = array<i32>} : memref<2x8x32xf32, #tpu.memory_space<vmem>>, vector<2x8x32xf32>,
    return
  }
  func.func @transform_0(%arg0: i32) -> (i32, i32, i32) {
    %c0_i32 = arith.constant 0 : i32
    %c0_i32_0 = arith.constant 0 : i32
    %c0_i32_1 = arith.constant 0 : i32
    return %arg0, %c0_i32, %c0_i32_0 : i32, i32, i32
  }
  func.func @transform_1(%arg0: i32) -> (i32, i32, i32) {
    %c0_i32 = arith.constant 0 : i32
    %c0_i32_0 = arith.constant 0 : i32
    %c0_i32_1 = arith.constant 0 : i32
    return %arg0, %c0_i32, %c0_i32_0 : i32, i32, i32
  }
  func.func @transform_2(%arg0: i32) -> (i32, i32, i32) {
    %c0_i32 = arith.constant 0 : i32
    %c0_i32_0 = arith.constant 0 : i32
    %c0_i32_1 = arith.constant 0 : i32
    return %arg0, %c0_i32, %c0_i32_0 : i32, i32, i32
  }
  func.func @transform_3(%arg0: i32) -> (i32, i32, i32) {
    %c0_i32 = arith.constant 0 : i32
    %c0_i32_0 = arith.constant 0 : i32
    %c0_i32_1 = arith.constant 0 : i32
    return %arg0, %c0_i32, %c0_i32_0 : i32, i32, i32
  }
  func.func @transform_4(%arg0: i32) -> (i32, i32, i32) {
    %c0_i32 = arith.constant 0 : i32
    %c0_i32_0 = arith.constant 0 : i32
    %c0_i32_1 = arith.constant 0 : i32
    %c0_i32_2 = arith.constant 0 : i32
    return %c0_i32, %c0_i32_0, %c0_i32_1 : i32, i32, i32
  }
  func.func @transform_5(%arg0: i32) -> (i32, i32, i32) {
    %c0_i32 = arith.constant 0 : i32
    %c0_i32_0 = arith.constant 0 : i32
    %c0_i32_1 = arith.constant 0 : i32
    %c0_i32_2 = arith.constant 0 : i32
    return %c0_i32, %c0_i32_0, %c0_i32_1 : i32, i32, i32
  }
  func.func @transform_6(%arg0: i32) -> (i32, i32) {
    %c0_i32 = arith.constant 0 : i32
    %c0_i32_0 = arith.constant 0 : i32
    %c0_i32_1 = arith.constant 0 : i32
    return %c0_i32, %c0_i32_0 : i32, i32
  }
  func.func @transform_7(%arg0: i32) -> (i32, i32) {
    %c0_i32 = arith.constant 0 : i32
    %c0_i32_0 = arith.constant 0 : i32
    %c0_i32_1 = arith.constant 0 : i32
    return %c0_i32, %c0_i32_0 : i32, i32
  }
  func.func @transform_8(%arg0: i32) -> (i32, i32, i32) {
    %c0_i32 = arith.constant 0 : i32
    %c0_i32_0 = arith.constant 0 : i32
    %c0_i32_1 = arith.constant 0 : i32
    return %arg0, %c0_i32, %c0_i32_0 : i32, i32, i32
  }
}

</mosaic_0001>

<llo_original>
// kernel: tpu_custom_call.1
$region0: #{tpu_custom_call.1}
  #allocation0 [shape = 'u32[]', space=smem, size = 0x4, offset = 0x4, fixed_abs, tag = 'smem constant byte address 0x4 - core index']
  #allocation1 [shape = 'u32[144,128]{1,0:T(1,128)}', space=vmem, size = 0x12000, scoped, tag = 'internal scratch']
  %s0 = inlined_call_operand.hbm [shape: f32[2,8,32], index: 0, kind: input, shape index: {}]
  %s1 = inlined_call_operand.hbm [shape: f32[2,8,32], index: 1, kind: input, shape index: {}]
  %s2 = inlined_call_operand.hbm [shape: f32[2,8,32], index: 2, kind: input, shape index: {}]
  %s3 = inlined_call_operand.vmem [shape: s8[2,8,8], index: 3, kind: input, shape index: {}]
  %s4 = inlined_call_operand.hbm [shape: f32[3,32,32], index: 4, kind: input, shape index: {}]
  %s5 = inlined_call_operand.vmem [shape: f32[3,1,32], index: 5, kind: input, shape index: {}]
  %s6 = inlined_call_operand.hbm [shape: f32[32,32], index: 6, kind: input, shape index: {}]
  %s7 = inlined_call_operand.vmem [shape: f32[1,32], index: 7, kind: input, shape index: {}]
  %s8 = inlined_call_operand.hbm [shape: f32[2,8,32], index: 8, kind: output, shape index: {}]
  %s9 = sld [smem:[#allocation0]]
  $region62: #{tpu_custom_call.1} parent=0
    _
  %s11 = ssub.s32 1, %s9
  %s12 = scalar_select 0, %s11, %s9
  $region1: #{tpu_custom_call.1} parent=0
    #allocation2 [shape = 'u8[8192]{0}', space=vmem, size = 0x2000, scoped, tag = 'input window, operand 0, single buffered']
    #allocation3 [shape = 's32[1]{0}', space=sflag, size = 0x4, scoped, tag = 'scoped memory for tpu_custom_call.1']
    #allocation4 [shape = 's32[1]{0}', space=sflag, size = 0x4, scoped, tag = 'scoped memory for tpu_custom_call.1']
    #allocation5 [shape = 'u8[8192]{0}', space=vmem, size = 0x2000, scoped, tag = 'input window, operand 1, single buffered']
    #allocation6 [shape = 's32[1]{0}', space=sflag, size = 0x4, scoped, tag = 'scoped memory for tpu_custom_call.1']
    #allocation7 [shape = 'u8[8192]{0}', space=vmem, size = 0x2000, scoped, tag = 'input window, operand 2, single buffered']
    #allocation8 [shape = 'u8[49152]{0}', space=vmem, size = 0xc000, scoped, tag = 'input window, operand 4, single buffered']
    #allocation9 [shape = 's32[1]{0}', space=sflag, size = 0x4, scoped, tag = 'scoped memory for tpu_custom_call.1']
    #allocation10 [shape = 'u8[16384]{0}', space=vmem, size = 0x4000, scoped, tag = 'input window, operand 6, single buffered']
    #allocation11 [shape = 'u8[8192]{0}', space=vmem, size = 0x2000, scoped, tag = 'output window, operand 0, single buffered']
    %13 = vsyncpa [#allocation3], 0
    %14 = vsyncpa [#allocation6], 0
    %15 = vsyncpa [#allocation9], 0
    %16 = vsyncpa [#allocation4], 0
    // Predicated region
    $region2: #{tpu_custom_call.1} parent=1 // pred_check
      _
    $region3: #{tpu_custom_call.1} parent=1 // pred_check_branch
      %18 = sbr.rel (0) target = $region5
    $region4: #{tpu_custom_call.1} parent=1 // pred_region
      %s20 = ssub.s32 256, 256
      %21 = vsyncadd [#allocation3], %s20
      %s22 = sshll.u32 [#allocation2], 4
      %s23 = int_to_ptr.vmem [resolvable:$true] %s22
      %28 = dma.hbm_to_vmem [thread:$0]  %s0, 256, %s23, [#allocation3], 128, 128, 8
    $region5: #{tpu_custom_call.1} parent=1 // pred_fallthru
      _
    // Predicated region
    $region6: #{tpu_custom_call.1} parent=1 // pred_check
      _
    $region7: #{tpu_custom_call.1} parent=1 // pred_check_branch
      %30 = sbr.rel (0) target = $region9
    $region8: #{tpu_custom_call.1} parent=1 // pred_region
      %s32 = ssub.s32 256, 256
      %33 = vsyncadd [#allocation6], %s32
      %s34 = sshll.u32 [#allocation5], 4
      %s35 = int_to_ptr.vmem [resolvable:$true] %s34
      %40 = dma.hbm_to_vmem [thread:$0]  %s1, 256, %s35, [#allocation6], 128, 128, 8
    $region9: #{tpu_custom_call.1} parent=1 // pred_fallthru
      _
    // Predicated region
    $region10: #{tpu_custom_call.1} parent=1 // pred_check
      _
    $region11: #{tpu_custom_call.1} parent=1 // pred_check_branch
      %42 = sbr.rel (0) target = $region13
    $region12: #{tpu_custom_call.1} parent=1 // pred_region
      %s44 = ssub.s32 256, 256
      %45 = vsyncadd [#allocation6], %s44
      %s46 = sshll.u32 [#allocation7], 4
      %s47 = int_to_ptr.vmem [resolvable:$true] %s46
      %52 = dma.hbm_to_vmem [thread:$0]  %s2, 256, %s47, [#allocation6], 128, 128, 8
    $region13: #{tpu_custom_call.1} parent=1 // pred_fallthru
      _
    // Predicated region
    $region14: #{tpu_custom_call.1} parent=1 // pred_check
      _
    $region15: #{tpu_custom_call.1} parent=1 // pred_check_branch
      %54 = sbr.rel (0) target = $region17
    $region16: #{tpu_custom_call.1} parent=1 // pred_region
      _
    $region17: #{tpu_custom_call.1} parent=1 // pred_fallthru
      _
    // Predicated region
    $region18: #{tpu_custom_call.1} parent=1 // pred_check
      _
    $region19: #{tpu_custom_call.1} parent=1 // pred_check_branch
      %56 = sbr.rel (0) target = $region21
    $region20: #{tpu_custom_call.1} parent=1 // pred_region
      %s58 = ssub.s32 1536, 1536
      %59 = vsyncadd [#allocation9], %s58
      %s60 = sshll.u32 [#allocation8], 4
      %s61 = int_to_ptr.vmem [resolvable:$true] %s60
      %66 = dma.hbm_to_vmem [thread:$0]  %s4, 1536, %s61, [#allocation9], 128, 128, 8
    $region21: #{tpu_custom_call.1} parent=1 // pred_fallthru
      _
    // Predicated region
    $region22: #{tpu_custom_call.1} parent=1 // pred_check
      _
    $region23: #{tpu_custom_call.1} parent=1 // pred_check_branch
      %68 = sbr.rel (0) target = $region25
    $region24: #{tpu_custom_call.1} parent=1 // pred_region
      _
    $region25: #{tpu_custom_call.1} parent=1 // pred_fallthru
      _
    // Predicated region
    $region26: #{tpu_custom_call.1} parent=1 // pred_check
      _
    $region27: #{tpu_custom_call.1} parent=1 // pred_check_branch
      %70 = sbr.rel (0) target = $region29
    $region28: #{tpu_custom_call.1} parent=1 // pred_region
      %s72 = ssub.s32 512, 512
      %73 = vsyncadd [#allocation9], %s72
      %s74 = sshll.u32 [#allocation10], 4
      %s75 = int_to_ptr.vmem [resolvable:$true] %s74
      %80 = dma.hbm_to_vmem [thread:$0]  %s6, 512, %s75, [#allocation9], 128, 128, 8
    $region29: #{tpu_custom_call.1} parent=1 // pred_fallthru
      _
    // Predicated region
    $region30: #{tpu_custom_call.1} parent=1 // pred_check
      _
    $region31: #{tpu_custom_call.1} parent=1 // pred_check_branch
      %82 = sbr.rel (0) target = $region33
    $region32: #{tpu_custom_call.1} parent=1 // pred_region
      _
    $region33: #{tpu_custom_call.1} parent=1 // pred_fallthru
      _
    // Predicated region
    $region34: #{tpu_custom_call.1} parent=1 // pred_check
      _
    $region35: #{tpu_custom_call.1} parent=1 // pred_check_branch
      %84 = sbr.rel (0) target = $region37
    $region36: #{tpu_custom_call.1} parent=1 // pred_region
      %85 = dma.done [#allocation3], 256
    $region37: #{tpu_custom_call.1} parent=1 // pred_fallthru
      _
    // Predicated region
    $region38: #{tpu_custom_call.1} parent=1 // pred_check
      _
    $region39: #{tpu_custom_call.1} parent=1 // pred_check_branch
      %87 = sbr.rel (0) target = $region41
    $region40: #{tpu_custom_call.1} parent=1 // pred_region
      %88 = dma.done [#allocation6], 256
    $region41: #{tpu_custom_call.1} parent=1 // pred_fallthru
      _
    // Predicated region
    $region42: #{tpu_custom_call.1} parent=1 // pred_check
      _
    $region43: #{tpu_custom_call.1} parent=1 // pred_check_branch
      %90 = sbr.rel (0) target = $region45
    $region44: #{tpu_custom_call.1} parent=1 // pred_region
      %91 = dma.done [#allocation6], 256
    $region45: #{tpu_custom_call.1} parent=1 // pred_fallthru
      _
    // Predicated region
    $region46: #{tpu_custom_call.1} parent=1 // pred_check
      _
    $region47: #{tpu_custom_call.1} parent=1 // pred_check_branch
      %93 = sbr.rel (0) target = $region49
    $region48: #{tpu_custom_call.1} parent=1 // pred_region
      %94 = dma.done [#allocation9], 1536
    $region49: #{tpu_custom_call.1} parent=1 // pred_fallthru
      _
    // Predicated region
    $region50: #{tpu_custom_call.1} parent=1 // pred_check
      _
    $region51: #{tpu_custom_call.1} parent=1 // pred_check_branch
      %96 = sbr.rel (0) target = $region53
    $region52: #{tpu_custom_call.1} parent=1 // pred_region
      %97 = dma.done [#allocation9], 512
    $region53: #{tpu_custom_call.1} parent=1 // pred_fallthru
      _
    %v100 = vld [vmem:[#allocation2] sm:$0xff]
    %v101 = vld [vmem:[#allocation2 + $0x8] sm:$0xff]
    %v102 = vld [vmem:[#allocation5] sm:$0xff]
    %v103 = vld [vmem:[#allocation5 + $0x8] sm:$0xff]
    %v104 = vld [vmem:[#allocation7] sm:$0xff]
    %v105 = vld [vmem:[#allocation7 + $0x8] sm:$0xff]
    %v106 = vld [vmem:[#allocation8] sm:$0xff]
    %v107 = vld [vmem:[#allocation8 + $0x8] sm:$0xff]
    %v108 = vld [vmem:[#allocation8 + $0x10] sm:$0xff]
    %v109 = vld [vmem:[#allocation8 + $0x18] sm:$0xff]
    %v110 = vld [vmem:[%s5] sm:$0x1]
    %v112 = vlaneseq
    %v113 = vshrl.u32 %v112, 7
    %v114 = vsub.s32 0, %v113
    %v115 = vrot.slane %v110, %v114
    %vm117 = vcmask 261120
    %v119 = vsel %vm117, %v100, 0
    %v122 = vsel %vm117, %v101, 0
    %124 = vmatprep.subr.mxu0 0.0
    %125 = vmatpush1.msra.mxu0 %v106
    %126 = vmatprep.subr.mxu0 0.0
    %127 = vmatpush1.msra.mxu0 %v107
    %128 = vmatprep.subr.mxu0 0.0
    %129 = vmatpush1.msra.mxu0 %v108
    %130 = vmatprep.subr.mxu0 0.0
    %131 = vmatpush1.msra.mxu0 %v109
    %132 = vmatprep.subr.mxu0 0.0
    %133 = vmatpush1.msra.mxu0 0.0
    %134 = vmatprep.subr.mxu0 0.0
    %135 = vmatpush1.msra.mxu0 0.0
    %136 = vmatprep.subr.mxu0 0.0
    %137 = vmatpush1.msra.mxu0 0.0
    %138 = vmatprep.subr.mxu0 0.0
    %139 = vmatpush1.msra.mxu0 0.0
    %140 = vmatprep.subr.mxu0 0.0
    %141 = vmatpush1.msra.mxu0 0.0
    %142 = vmatprep.subr.mxu0 0.0
    %143 = vmatpush1.msra.mxu0 0.0
    %144 = vmatprep.subr.mxu0 0.0
    %145 = vmatpush1.msra.mxu0 0.0
    %146 = vmatprep.subr.mxu0 0.0
    %147 = vmatpush1.msra.mxu0 0.0
    %148 = vmatprep.subr.mxu0 0.0
    %149 = vmatpush1.msra.mxu0 0.0
    %150 = vmatprep.subr.mxu0 0.0
    %151 = vmatpush1.msra.mxu0 0.0
    %152 = vmatprep.subr.mxu0 0.0
    %153 = vmatpush1.msra.mxu0 0.0
    %154 = vmatprep.subr.mxu0 0.0
    %155 = vmatpush1.msra.mxu0 0.0
    %156 = vmatprep.subr.mxu0 0.0
    %157 = vmatpush1.msra.mxu0 0.0
    %158 = vmatprep.subr.mxu0 0.0
    %159 = vmatpush1.msra.mxu0 0.0
    %160 = vmatprep.subr.mxu0 0.0
    %161 = vmatpush1.msra.mxu0 0.0
    %162 = vmatprep.subr.mxu0 0.0
    %163 = vmatpush1.msra.mxu0 0.0
    %164 = vmatprep.subr.mxu0 0.0
    %165 = vmatpush1.msra.mxu0 0.0
    %166 = vmatprep.subr.mxu0 0.0
    %167 = vmatpush1.msra.mxu0 0.0
    %168 = vmatprep.subr.mxu0 0.0
    %169 = vmatpush1.msra.mxu0 0.0
    %170 = vmatprep.subr.mxu0 0.0
    %171 = vmatpush1.msra.mxu0 0.0
    %172 = vmatprep.subr.mxu0 0.0
    %173 = vmatpush1.msra.mxu0 0.0
    %174 = vmatprep.subr.mxu0 0.0
    %175 = vmatpush1.msra.mxu0 0.0
    %176 = vmatprep.subr.mxu0 0.0
    %177 = vmatpush1.msra.mxu0 0.0
    %178 = vmatprep.subr.mxu0 0.0
    %179 = vmatpush1.msra.mxu0 0.0
    %180 = vmatprep.subr.mxu0 0.0
    %181 = vmatpush1.msra.mxu0 0.0
    %182 = vmatprep.subr.mxu0 0.0
    %183 = vmatpush1.msra.mxu0 0.0
    %184 = vmatprep.subr.mxu0 0.0
    %185 = vmatpush1.msra.mxu0 0.0
    %186 = vmatprep.subr.mxu0 0.0
    %187 = vmatpush1.msra.mxu0 0.0
    %188 = vmatprep.mubr.f32.mxu0 0.0
    %189 = vmatmul.mubr.f32.gmra.mrb[0].mxu0 %v119
    %v190 = vpop.f32.mrb[0].mxu0
    %v191 = vadd.f32 %v115, %v190
    %v192 = vpop.f32.mrb[0].mxu0
    %193 = vmatprep.mubr.f32.mxu0 0.0
    %194 = vmatmul.mubr.f32.gmra.mrb[0].mxu0 %v122
    %v195 = vpop.f32.mrb[0].mxu0
    %v196 = vadd.f32 %v115, %v195
    %v197 = vpop.f32.mrb[0].mxu0
    %198 = vdwg.mxu0
    %v199 = vmul.f32 %v191, 0.35355338
    %v200 = vmul.f32 %v196, 0.35355338
    %s201 = scalar_lea.vmem [#allocation8], 32
    %v202 = vld [vmem:[%s201] sm:$0xff]
    %v203 = vld [vmem:[%s201 + $0x8] sm:$0xff]
    %v204 = vld [vmem:[%s201 + $0x10] sm:$0xff]
    %v205 = vld [vmem:[%s201 + $0x18] sm:$0xff]
    %s206 = scalar_lea.vmem %s5, 1
    %v207 = vld [vmem:[%s206] sm:$0x1]
    %v209 = vlaneseq
    %v210 = vshrl.u32 %v209, 7
    %v211 = vsub.s32 0, %v210
    %v212 = vrot.slane %v207, %v211
    %v215 = vsel %vm117, %v102, 0
    %v218 = vsel %vm117, %v103, 0
    %220 = vmatprep.subr.mxu0 0.0
    %221 = vmatpush1.msra.mxu0 %v202
    %222 = vmatprep.subr.mxu0 0.0
    %223 = vmatpush1.msra.mxu0 %v203
    %224 = vmatprep.subr.mxu0 0.0
    %225 = vmatpush1.msra.mxu0 %v204
    %226 = vmatprep.subr.mxu0 0.0
    %227 = vmatpush1.msra.mxu0 %v205
    %228 = vmatprep.subr.mxu0 0.0
    %229 = vmatpush1.msra.mxu0 0.0
    %230 = vmatprep.subr.mxu0 0.0
    %231 = vmatpush1.msra.mxu0 0.0
    %232 = vmatprep.subr.mxu0 0.0
    %233 = vmatpush1.msra.mxu0 0.0
    %234 = vmatprep.subr.mxu0 0.0
    %235 = vmatpush1.msra.mxu0 0.0
    %236 = vmatprep.subr.mxu0 0.0
    %237 = vmatpush1.msra.mxu0 0.0
    %238 = vmatprep.subr.mxu0 0.0
    %239 = vmatpush1.msra.mxu0 0.0
    %240 = vmatprep.subr.mxu0 0.0
    %241 = vmatpush1.msra.mxu0 0.0
    %242 = vmatprep.subr.mxu0 0.0
    %243 = vmatpush1.msra.mxu0 0.0
    %244 = vmatprep.subr.mxu0 0.0
    %245 = vmatpush1.msra.mxu0 0.0
    %246 = vmatprep.subr.mxu0 0.0
    %247 = vmatpush1.msra.mxu0 0.0
    %248 = vmatprep.subr.mxu0 0.0
    %249 = vmatpush1.msra.mxu0 0.0
    %250 = vmatprep.subr.mxu0 0.0
    %251 = vmatpush1.msra.mxu0 0.0
    %252 = vmatprep.subr.mxu0 0.0
    %253 = vmatpush1.msra.mxu0 0.0
    %254 = vmatprep.subr.mxu0 0.0
    %255 = vmatpush1.msra.mxu0 0.0
    %256 = vmatprep.subr.mxu0 0.0
    %257 = vmatpush1.msra.mxu0 0.0
    %258 = vmatprep.subr.mxu0 0.0
    %259 = vmatpush1.msra.mxu0 0.0
    %260 = vmatprep.subr.mxu0 0.0
    %261 = vmatpush1.msra.mxu0 0.0
    %262 = vmatprep.subr.mxu0 0.0
    %263 = vmatpush1.msra.mxu0 0.0
    %264 = vmatprep.subr.mxu0 0.0
    %265 = vmatpush1.msra.mxu0 0.0
    %266 = vmatprep.subr.mxu0 0.0
    %267 = vmatpush1.msra.mxu0 0.0
    %268 = vmatprep.subr.mxu0 0.0
    %269 = vmatpush1.msra.mxu0 0.0
    %270 = vmatprep.subr.mxu0 0.0
    %271 = vmatpush1.msra.mxu0 0.0
    %272 = vmatprep.subr.mxu0 0.0
    %273 = vmatpush1.msra.mxu0 0.0
    %274 = vmatprep.subr.mxu0 0.0
    %275 = vmatpush1.msra.mxu0 0.0
    %276 = vmatprep.subr.mxu0 0.0
    %277 = vmatpush1.msra.mxu0 0.0
    %278 = vmatprep.subr.mxu0 0.0
    %279 = vmatpush1.msra.mxu0 0.0
    %280 = vmatprep.subr.mxu0 0.0
    %281 = vmatpush1.msra.mxu0 0.0
    %282 = vmatprep.subr.mxu0 0.0
    %283 = vmatpush1.msra.mxu0 0.0
    %284 = vmatprep.mubr.f32.mxu0 0.0
    %285 = vmatmul.mubr.f32.gmra.mrb[0].mxu0 %v215
    %v286 = vpop.f32.mrb[0].mxu0
    %v287 = vadd.f32 %v212, %v286
    %v288 = vpop.f32.mrb[0].mxu0
    %289 = vmatprep.mubr.f32.mxu0 0.0
    %290 = vmatmul.mubr.f32.gmra.mrb[0].mxu0 %v218
    %v291 = vpop.f32.mrb[0].mxu0
    %v292 = vadd.f32 %v212, %v291
    %v293 = vpop.f32.mrb[0].mxu0
    %294 = vdwg.mxu0
    %s295 = scalar_lea.vmem [#allocation8], 64
    %v296 = vld [vmem:[%s295] sm:$0xff]
    %v297 = vld [vmem:[%s295 + $0x8] sm:$0xff]
    %v298 = vld [vmem:[%s295 + $0x10] sm:$0xff]
    %v299 = vld [vmem:[%s295 + $0x18] sm:$0xff]
    %s300 = scalar_lea.vmem %s5, 2
    %v301 = vld [vmem:[%s300] sm:$0x1]
    %v303 = vlaneseq
    %v304 = vshrl.u32 %v303, 7
    %v305 = vsub.s32 0, %v304
    %v306 = vrot.slane %v301, %v305
    %v309 = vsel %vm117, %v104, 0
    %v312 = vsel %vm117, %v105, 0
    %314 = vmatprep.subr.mxu0 0.0
    %315 = vmatpush1.msra.mxu0 %v296
    %316 = vmatprep.subr.mxu0 0.0
    %317 = vmatpush1.msra.mxu0 %v297
    %318 = vmatprep.subr.mxu0 0.0
    %319 = vmatpush1.msra.mxu0 %v298
    %320 = vmatprep.subr.mxu0 0.0
    %321 = vmatpush1.msra.mxu0 %v299
    %322 = vmatprep.subr.mxu0 0.0
    %323 = vmatpush1.msra.mxu0 0.0
    %324 = vmatprep.subr.mxu0 0.0
    %325 = vmatpush1.msra.mxu0 0.0
    %326 = vmatprep.subr.mxu0 0.0
    %327 = vmatpush1.msra.mxu0 0.0
    %328 = vmatprep.subr.mxu0 0.0
    %329 = vmatpush1.msra.mxu0 0.0
    %330 = vmatprep.subr.mxu0 0.0
    %331 = vmatpush1.msra.mxu0 0.0
    %332 = vmatprep.subr.mxu0 0.0
    %333 = vmatpush1.msra.mxu0 0.0
    %334 = vmatprep.subr.mxu0 0.0
    %335 = vmatpush1.msra.mxu0 0.0
    %336 = vmatprep.subr.mxu0 0.0
    %337 = vmatpush1.msra.mxu0 0.0
    %338 = vmatprep.subr.mxu0 0.0
    %339 = vmatpush1.msra.mxu0 0.0
    %340 = vmatprep.subr.mxu0 0.0
    %341 = vmatpush1.msra.mxu0 0.0
    %342 = vmatprep.subr.mxu0 0.0
    %343 = vmatpush1.msra.mxu0 0.0
    %344 = vmatprep.subr.mxu0 0.0
    %345 = vmatpush1.msra.mxu0 0.0
    %346 = vmatprep.subr.mxu0 0.0
    %347 = vmatpush1.msra.mxu0 0.0
    %348 = vmatprep.subr.mxu0 0.0
    %349 = vmatpush1.msra.mxu0 0.0
    %350 = vmatprep.subr.mxu0 0.0
    %351 = vmatpush1.msra.mxu0 0.0
    %352 = vmatprep.subr.mxu0 0.0
    %353 = vmatpush1.msra.mxu0 0.0
    %354 = vmatprep.subr.mxu0 0.0
    %355 = vmatpush1.msra.mxu0 0.0
    %356 = vmatprep.subr.mxu0 0.0
    %357 = vmatpush1.msra.mxu0 0.0
    %358 = vmatprep.subr.mxu0 0.0
    %359 = vmatpush1.msra.mxu0 0.0
    %360 = vmatprep.subr.mxu0 0.0
    %361 = vmatpush1.msra.mxu0 0.0
    %362 = vmatprep.subr.mxu0 0.0
    %363 = vmatpush1.msra.mxu0 0.0
    %364 = vmatprep.subr.mxu0 0.0
    %365 = vmatpush1.msra.mxu0 0.0
    %366 = vmatprep.subr.mxu0 0.0
    %367 = vmatpush1.msra.mxu0 0.0
    %368 = vmatprep.subr.mxu0 0.0
    %369 = vmatpush1.msra.mxu0 0.0
    %370 = vmatprep.subr.mxu0 0.0
    %371 = vmatpush1.msra.mxu0 0.0
    %372 = vmatprep.subr.mxu0 0.0
    %373 = vmatpush1.msra.mxu0 0.0
    %374 = vmatprep.subr.mxu0 0.0
    %375 = vmatpush1.msra.mxu0 0.0
    %376 = vmatprep.subr.mxu0 0.0
    %377 = vmatpush1.msra.mxu0 0.0
    %378 = vmatprep.mubr.f32.mxu0 0.0
    %379 = vmatmul.mubr.f32.gmra.mrb[0].mxu0 %v309
    %v380 = vpop.f32.mrb[0].mxu0
    %v381 = vadd.f32 %v306, %v380
    %v382 = vpop.f32.mrb[0].mxu0
    %383 = vmatprep.mubr.f32.mxu0 0.0
    %384 = vmatmul.mubr.f32.gmra.mrb[0].mxu0 %v312
    %v385 = vpop.f32.mrb[0].mxu0
    %v386 = vadd.f32 %v306, %v385
    %v387 = vpop.f32.mrb[0].mxu0
    %388 = vdwg.mxu0
    %391 = vrot.lane.b32.xlu0 %v199, 120
    %v392 = vpop.permute.xlu0 %391
    %393 = vrot.lane.b32.xlu0 %v200, 120
    %v394 = vpop.permute.xlu0 %393
    %395 = vrot.lane.b32.xlu0 %v199, 112
    %v396 = vpop.permute.xlu0 %395
    %397 = vrot.lane.b32.xlu0 %v200, 112
    %v398 = vpop.permute.xlu0 %397
    %399 = vrot.lane.b32.xlu0 %v199, 104
    %v400 = vpop.permute.xlu0 %399
    %401 = vrot.lane.b32.xlu0 %v200, 104
    %v402 = vpop.permute.xlu0 %401
    %405 = vrot.lane.b32.xlu0 %v287, 120
    %v406 = vpop.permute.xlu0 %405
    %407 = vrot.lane.b32.xlu0 %v292, 120
    %v408 = vpop.permute.xlu0 %407
    %409 = vrot.lane.b32.xlu0 %v287, 112
    %v410 = vpop.permute.xlu0 %409
    %411 = vrot.lane.b32.xlu0 %v292, 112
    %v412 = vpop.permute.xlu0 %411
    %413 = vrot.lane.b32.xlu0 %v287, 104
    %v414 = vpop.permute.xlu0 %413
    %415 = vrot.lane.b32.xlu0 %v292, 104
    %v416 = vpop.permute.xlu0 %415
    %419 = vrot.lane.b32.xlu0 %v381, 120
    %v420 = vpop.permute.xlu0 %419
    %421 = vrot.lane.b32.xlu0 %v386, 120
    %v422 = vpop.permute.xlu0 %421
    %425 = vrot.lane.b32.xlu0 %v381, 112
    %v426 = vpop.permute.xlu0 %425
    %427 = vrot.lane.b32.xlu0 %v386, 112
    %v428 = vpop.permute.xlu0 %427
    %431 = vrot.lane.b32.xlu0 %v381, 104
    %v432 = vpop.permute.xlu0 %431
    %433 = vrot.lane.b32.xlu0 %v386, 104
    %v434 = vpop.permute.xlu0 %433
    %vm437 = vcmask 64512
    %v438 = vsel %vm437, %v199, 0
    %v440 = vsel %vm437, %v287, 0
    %442 = vmatprep.subr.mxu0 0.0
    %443 = vmatpush1.xpose.msra.mxu0 %v440
    %444 = vmatprep.subr.mxu0 0.0
    %445 = vmatpush1.xpose.msra.mxu0 0.0
    %446 = vmatprep.subr.mxu0 0.0
    %447 = vmatpush1.xpose.msra.mxu0 0.0
    %448 = vmatprep.subr.mxu0 0.0
    %449 = vmatpush1.xpose.msra.mxu0 0.0
    %450 = vmatprep.subr.mxu0 0.0
    %451 = vmatpush1.xpose.msra.mxu0 0.0
    %452 = vmatprep.subr.mxu0 0.0
    %453 = vmatpush1.xpose.msra.mxu0 0.0
    %454 = vmatprep.subr.mxu0 0.0
    %455 = vmatpush1.xpose.msra.mxu0 0.0
    %456 = vmatprep.subr.mxu0 0.0
    %457 = vmatpush1.xpose.msra.mxu0 0.0
    %458 = vmatprep.subr.mxu0 0.0
    %459 = vmatpush1.xpose.msra.mxu0 0.0
    %460 = vmatprep.subr.mxu0 0.0
    %461 = vmatpush1.xpose.msra.mxu0 0.0
    %462 = vmatprep.subr.mxu0 0.0
    %463 = vmatpush1.xpose.msra.mxu0 0.0
    %464 = vmatprep.subr.mxu0 0.0
    %465 = vmatpush1.xpose.msra.mxu0 0.0
    %466 = vmatprep.subr.mxu0 0.0
    %467 = vmatpush1.xpose.msra.mxu0 0.0
    %468 = vmatprep.subr.mxu0 0.0
    %469 = vmatpush1.xpose.msra.mxu0 0.0
    %470 = vmatprep.subr.mxu0 0.0
    %471 = vmatpush1.xpose.msra.mxu0 0.0
    %472 = vmatprep.subr.mxu0 0.0
    %473 = vmatpush1.xpose.msra.mxu0 0.0
    %474 = vmatprep.subr.mxu0 0.0
    %475 = vmatpush1.xpose.msra.mxu0 0.0
    %476 = vmatprep.subr.mxu0 0.0
    %477 = vmatpush1.xpose.msra.mxu0 0.0
    %478 = vmatprep.subr.mxu0 0.0
    %479 = vmatpush1.xpose.msra.mxu0 0.0
    %480 = vmatprep.subr.mxu0 0.0
    %481 = vmatpush1.xpose.msra.mxu0 0.0
    %482 = vmatprep.subr.mxu0 0.0
    %483 = vmatpush1.xpose.msra.mxu0 0.0
    %484 = vmatprep.subr.mxu0 0.0
    %485 = vmatpush1.xpose.msra.mxu0 0.0
    %486 = vmatprep.subr.mxu0 0.0
    %487 = vmatpush1.xpose.msra.mxu0 0.0
    %488 = vmatprep.subr.mxu0 0.0
    %489 = vmatpush1.xpose.msra.mxu0 0.0
    %490 = vmatprep.subr.mxu0 0.0
    %491 = vmatpush1.xpose.msra.mxu0 0.0
    %492 = vmatprep.subr.mxu0 0.0
    %493 = vmatpush1.xpose.msra.mxu0 0.0
    %494 = vmatprep.subr.mxu0 0.0
    %495 = vmatpush1.xpose.msra.mxu0 0.0
    %496 = vmatprep.subr.mxu0 0.0
    %497 = vmatpush1.xpose.msra.mxu0 0.0
    %498 = vmatprep.subr.mxu0 0.0
    %499 = vmatpush1.xpose.msra.mxu0 0.0
    %500 = vmatprep.subr.mxu0 0.0
    %501 = vmatpush1.xpose.msra.mxu0 0.0
    %502 = vmatprep.subr.mxu0 0.0
    %503 = vmatpush1.xpose.msra.mxu0 0.0
    %504 = vmatprep.subr.mxu0 0.0
    %505 = vmatpush1.xpose.msra.mxu0 0.0
    %506 = vmatprep.mubr.f32.mxu0 0.0
    %507 = vmatmul.mubr.f32.gmra.mrb[0].mxu0 %v438
    %v508 = vpop.f32.mrb[0].mxu0
    %v509 = vadd.f32 0.0, %v508
    %v510 = vpop.f32.mrb[0].mxu0
    %511 = vdwg.mxu0
    %v512 = vsel %vm437, %v392, 0
    %v514 = vsel %vm437, %v406, 0
    %516 = vmatprep.subr.mxu0 0.0
    %517 = vmatpush1.xpose.msra.mxu0 %v514
    %518 = vmatprep.subr.mxu0 0.0
    %519 = vmatpush1.xpose.msra.mxu0 0.0
    %520 = vmatprep.subr.mxu0 0.0
    %521 = vmatpush1.xpose.msra.mxu0 0.0
    %522 = vmatprep.subr.mxu0 0.0
    %523 = vmatpush1.xpose.msra.mxu0 0.0
    %524 = vmatprep.subr.mxu0 0.0
    %525 = vmatpush1.xpose.msra.mxu0 0.0
    %526 = vmatprep.subr.mxu0 0.0
    %527 = vmatpush1.xpose.msra.mxu0 0.0
    %528 = vmatprep.subr.mxu0 0.0
    %529 = vmatpush1.xpose.msra.mxu0 0.0
    %530 = vmatprep.subr.mxu0 0.0
    %531 = vmatpush1.xpose.msra.mxu0 0.0
    %532 = vmatprep.subr.mxu0 0.0
    %533 = vmatpush1.xpose.msra.mxu0 0.0
    %534 = vmatprep.subr.mxu0 0.0
    %535 = vmatpush1.xpose.msra.mxu0 0.0
    %536 = vmatprep.subr.mxu0 0.0
    %537 = vmatpush1.xpose.msra.mxu0 0.0
    %538 = vmatprep.subr.mxu0 0.0
    %539 = vmatpush1.xpose.msra.mxu0 0.0
    %540 = vmatprep.subr.mxu0 0.0
    %541 = vmatpush1.xpose.msra.mxu0 0.0
    %542 = vmatprep.subr.mxu0 0.0
    %543 = vmatpush1.xpose.msra.mxu0 0.0
    %544 = vmatprep.subr.mxu0 0.0
    %545 = vmatpush1.xpose.msra.mxu0 0.0
    %546 = vmatprep.subr.mxu0 0.0
    %547 = vmatpush1.xpose.msra.mxu0 0.0
    %548 = vmatprep.subr.mxu0 0.0
    %549 = vmatpush1.xpose.msra.mxu0 0.0
    %550 = vmatprep.subr.mxu0 0.0
    %551 = vmatpush1.xpose.msra.mxu0 0.0
    %552 = vmatprep.subr.mxu0 0.0
    %553 = vmatpush1.xpose.msra.mxu0 0.0
    %554 = vmatprep.subr.mxu0 0.0
    %555 = vmatpush1.xpose.msra.mxu0 0.0
    %556 = vmatprep.subr.mxu0 0.0
    %557 = vmatpush1.xpose.msra.mxu0 0.0
    %558 = vmatprep.subr.mxu0 0.0
    %559 = vmatpush1.xpose.msra.mxu0 0.0
    %560 = vmatprep.subr.mxu0 0.0
    %561 = vmatpush1.xpose.msra.mxu0 0.0
    %562 = vmatprep.subr.mxu0 0.0
    %563 = vmatpush1.xpose.msra.mxu0 0.0
    %564 = vmatprep.subr.mxu0 0.0
    %565 = vmatpush1.xpose.msra.mxu0 0.0
    %566 = vmatprep.subr.mxu0 0.0
    %567 = vmatpush1.xpose.msra.mxu0 0.0
    %568 = vmatprep.subr.mxu0 0.0
    %569 = vmatpush1.xpose.msra.mxu0 0.0
    %570 = vmatprep.subr.mxu0 0.0
    %571 = vmatpush1.xpose.msra.mxu0 0.0
    %572 = vmatprep.subr.mxu0 0.0
    %573 = vmatpush1.xpose.msra.mxu0 0.0
    %574 = vmatprep.subr.mxu0 0.0
    %575 = vmatpush1.xpose.msra.mxu0 0.0
    %576 = vmatprep.subr.mxu0 0.0
    %577 = vmatpush1.xpose.msra.mxu0 0.0
    %578 = vmatprep.subr.mxu0 0.0
    %579 = vmatpush1.xpose.msra.mxu0 0.0
    %580 = vmatprep.mubr.f32.mxu0 0.0
    %581 = vmatmul.mubr.f32.gmra.mrb[0].mxu0 %v512
    %v582 = vpop.f32.mrb[0].mxu0
    %v583 = vadd.f32 0.0, %v582
    %v584 = vpop.f32.mrb[0].mxu0
    %585 = vdwg.mxu0
    %v586 = vsel %vm437, %v396, 0
    %v588 = vsel %vm437, %v410, 0
    %590 = vmatprep.subr.mxu0 0.0
    %591 = vmatpush1.xpose.msra.mxu0 %v588
    %592 = vmatprep.subr.mxu0 0.0
    %593 = vmatpush1.xpose.msra.mxu0 0.0
    %594 = vmatprep.subr.mxu0 0.0
    %595 = vmatpush1.xpose.msra.mxu0 0.0
    %596 = vmatprep.subr.mxu0 0.0
    %597 = vmatpush1.xpose.msra.mxu0 0.0
    %598 = vmatprep.subr.mxu0 0.0
    %599 = vmatpush1.xpose.msra.mxu0 0.0
    %600 = vmatprep.subr.mxu0 0.0
    %601 = vmatpush1.xpose.msra.mxu0 0.0
    %602 = vmatprep.subr.mxu0 0.0
    %603 = vmatpush1.xpose.msra.mxu0 0.0
    %604 = vmatprep.subr.mxu0 0.0
    %605 = vmatpush1.xpose.msra.mxu0 0.0
    %606 = vmatprep.subr.mxu0 0.0
    %607 = vmatpush1.xpose.msra.mxu0 0.0
    %608 = vmatprep.subr.mxu0 0.0
    %609 = vmatpush1.xpose.msra.mxu0 0.0
    %610 = vmatprep.subr.mxu0 0.0
    %611 = vmatpush1.xpose.msra.mxu0 0.0
    %612 = vmatprep.subr.mxu0 0.0
    %613 = vmatpush1.xpose.msra.mxu0 0.0
    %614 = vmatprep.subr.mxu0 0.0
    %615 = vmatpush1.xpose.msra.mxu0 0.0
    %616 = vmatprep.subr.mxu0 0.0
    %617 = vmatpush1.xpose.msra.mxu0 0.0
    %618 = vmatprep.subr.mxu0 0.0
    %619 = vmatpush1.xpose.msra.mxu0 0.0
    %620 = vmatprep.subr.mxu0 0.0
    %621 = vmatpush1.xpose.msra.mxu0 0.0
    %622 = vmatprep.subr.mxu0 0.0
    %623 = vmatpush1.xpose.msra.mxu0 0.0
    %624 = vmatprep.subr.mxu0 0.0
    %625 = vmatpush1.xpose.msra.mxu0 0.0
    %626 = vmatprep.subr.mxu0 0.0
    %627 = vmatpush1.xpose.msra.mxu0 0.0
    %628 = vmatprep.subr.mxu0 0.0
    %629 = vmatpush1.xpose.msra.mxu0 0.0
    %630 = vmatprep.subr.mxu0 0.0
    %631 = vmatpush1.xpose.msra.mxu0 0.0
    %632 = vmatprep.subr.mxu0 0.0
    %633 = vmatpush1.xpose.msra.mxu0 0.0
    %634 = vmatprep.subr.mxu0 0.0
    %635 = vmatpush1.xpose.msra.mxu0 0.0
    %636 = vmatprep.subr.mxu0 0.0
    %637 = vmatpush1.xpose.msra.mxu0 0.0
    %638 = vmatprep.subr.mxu0 0.0
    %639 = vmatpush1.xpose.msra.mxu0 0.0
    %640 = vmatprep.subr.mxu0 0.0
    %641 = vmatpush1.xpose.msra.mxu0 0.0
    %642 = vmatprep.subr.mxu0 0.0
    %643 = vmatpush1.xpose.msra.mxu0 0.0
    %644 = vmatprep.subr.mxu0 0.0
    %645 = vmatpush1.xpose.msra.mxu0 0.0
    %646 = vmatprep.subr.mxu0 0.0
    %647 = vmatpush1.xpose.msra.mxu0 0.0
    %648 = vmatprep.subr.mxu0 0.0
    %649 = vmatpush1.xpose.msra.mxu0 0.0
    %650 = vmatprep.subr.mxu0 0.0
    %651 = vmatpush1.xpose.msra.mxu0 0.0
    %652 = vmatprep.subr.mxu0 0.0
    %653 = vmatpush1.xpose.msra.mxu0 0.0
    %654 = vmatprep.mubr.f32.mxu0 0.0
    %655 = vmatmul.mubr.f32.gmra.mrb[0].mxu0 %v586
    %v656 = vpop.f32.mrb[0].mxu0
    %v657 = vadd.f32 0.0, %v656
    %v658 = vpop.f32.mrb[0].mxu0
    %659 = vdwg.mxu0
    %v660 = vsel %vm437, %v400, 0
    %v662 = vsel %vm437, %v414, 0
    %664 = vmatprep.subr.mxu0 0.0
    %665 = vmatpush1.xpose.msra.mxu0 %v662
    %666 = vmatprep.subr.mxu0 0.0
    %667 = vmatpush1.xpose.msra.mxu0 0.0
    %668 = vmatprep.subr.mxu0 0.0
    %669 = vmatpush1.xpose.msra.mxu0 0.0
    %670 = vmatprep.subr.mxu0 0.0
    %671 = vmatpush1.xpose.msra.mxu0 0.0
    %672 = vmatprep.subr.mxu0 0.0
    %673 = vmatpush1.xpose.msra.mxu0 0.0
    %674 = vmatprep.subr.mxu0 0.0
    %675 = vmatpush1.xpose.msra.mxu0 0.0
    %676 = vmatprep.subr.mxu0 0.0
    %677 = vmatpush1.xpose.msra.mxu0 0.0
    %678 = vmatprep.subr.mxu0 0.0
    %679 = vmatpush1.xpose.msra.mxu0 0.0
    %680 = vmatprep.subr.mxu0 0.0
    %681 = vmatpush1.xpose.msra.mxu0 0.0
    %682 = vmatprep.subr.mxu0 0.0
    %683 = vmatpush1.xpose.msra.mxu0 0.0
    %684 = vmatprep.subr.mxu0 0.0
    %685 = vmatpush1.xpose.msra.mxu0 0.0
    %686 = vmatprep.subr.mxu0 0.0
    %687 = vmatpush1.xpose.msra.mxu0 0.0
    %688 = vmatprep.subr.mxu0 0.0
    %689 = vmatpush1.xpose.msra.mxu0 0.0
    %690 = vmatprep.subr.mxu0 0.0
    %691 = vmatpush1.xpose.msra.mxu0 0.0
    %692 = vmatprep.subr.mxu0 0.0
    %693 = vmatpush1.xpose.msra.mxu0 0.0
    %694 = vmatprep.subr.mxu0 0.0
    %695 = vmatpush1.xpose.msra.mxu0 0.0
    %696 = vmatprep.subr.mxu0 0.0
    %697 = vmatpush1.xpose.msra.mxu0 0.0
    %698 = vmatprep.subr.mxu0 0.0
    %699 = vmatpush1.xpose.msra.mxu0 0.0
    %700 = vmatprep.subr.mxu0 0.0
    %701 = vmatpush1.xpose.msra.mxu0 0.0
    %702 = vmatprep.subr.mxu0 0.0
    %703 = vmatpush1.xpose.msra.mxu0 0.0
    %704 = vmatprep.subr.mxu0 0.0
    %705 = vmatpush1.xpose.msra.mxu0 0.0
    %706 = vmatprep.subr.mxu0 0.0
    %707 = vmatpush1.xpose.msra.mxu0 0.0
    %708 = vmatprep.subr.mxu0 0.0
    %709 = vmatpush1.xpose.msra.mxu0 0.0
    %710 = vmatprep.subr.mxu0 0.0
    %711 = vmatpush1.xpose.msra.mxu0 0.0
    %712 = vmatprep.subr.mxu0 0.0
    %713 = vmatpush1.xpose.msra.mxu0 0.0
    %714 = vmatprep.subr.mxu0 0.0
    %715 = vmatpush1.xpose.msra.mxu0 0.0
    %716 = vmatprep.subr.mxu0 0.0
    %717 = vmatpush1.xpose.msra.mxu0 0.0
    %718 = vmatprep.subr.mxu0 0.0
    %719 = vmatpush1.xpose.msra.mxu0 0.0
    %720 = vmatprep.subr.mxu0 0.0
    %721 = vmatpush1.xpose.msra.mxu0 0.0
    %722 = vmatprep.subr.mxu0 0.0
    %723 = vmatpush1.xpose.msra.mxu0 0.0
    %724 = vmatprep.subr.mxu0 0.0
    %725 = vmatpush1.xpose.msra.mxu0 0.0
    %726 = vmatprep.subr.mxu0 0.0
    %727 = vmatpush1.xpose.msra.mxu0 0.0
    %728 = vmatprep.mubr.f32.mxu0 0.0
    %729 = vmatmul.mubr.f32.gmra.mrb[0].mxu0 %v660
    %v730 = vpop.f32.mrb[0].mxu0
    %v731 = vadd.f32 0.0, %v730
    %v732 = vpop.f32.mrb[0].mxu0
    %733 = vdwg.mxu0
    %v734 = vsel %vm437, %v200, 0
    %v736 = vsel %vm437, %v292, 0
    %738 = vmatprep.subr.mxu0 0.0
    %739 = vmatpush1.xpose.msra.mxu0 %v736
    %740 = vmatprep.subr.mxu0 0.0
    %741 = vmatpush1.xpose.msra.mxu0 0.0
    %742 = vmatprep.subr.mxu0 0.0
    %743 = vmatpush1.xpose.msra.mxu0 0.0
    %744 = vmatprep.subr.mxu0 0.0
    %745 = vmatpush1.xpose.msra.mxu0 0.0
    %746 = vmatprep.subr.mxu0 0.0
    %747 = vmatpush1.xpose.msra.mxu0 0.0
    %748 = vmatprep.subr.mxu0 0.0
    %749 = vmatpush1.xpose.msra.mxu0 0.0
    %750 = vmatprep.subr.mxu0 0.0
    %751 = vmatpush1.xpose.msra.mxu0 0.0
    %752 = vmatprep.subr.mxu0 0.0
    %753 = vmatpush1.xpose.msra.mxu0 0.0
    %754 = vmatprep.subr.mxu0 0.0
    %755 = vmatpush1.xpose.msra.mxu0 0.0
    %756 = vmatprep.subr.mxu0 0.0
    %757 = vmatpush1.xpose.msra.mxu0 0.0
    %758 = vmatprep.subr.mxu0 0.0
    %759 = vmatpush1.xpose.msra.mxu0 0.0
    %760 = vmatprep.subr.mxu0 0.0
    %761 = vmatpush1.xpose.msra.mxu0 0.0
    %762 = vmatprep.subr.mxu0 0.0
    %763 = vmatpush1.xpose.msra.mxu0 0.0
    %764 = vmatprep.subr.mxu0 0.0
    %765 = vmatpush1.xpose.msra.mxu0 0.0
    %766 = vmatprep.subr.mxu0 0.0
    %767 = vmatpush1.xpose.msra.mxu0 0.0
    %768 = vmatprep.subr.mxu0 0.0
    %769 = vmatpush1.xpose.msra.mxu0 0.0
    %770 = vmatprep.subr.mxu0 0.0
    %771 = vmatpush1.xpose.msra.mxu0 0.0
    %772 = vmatprep.subr.mxu0 0.0
    %773 = vmatpush1.xpose.msra.mxu0 0.0
    %774 = vmatprep.subr.mxu0 0.0
    %775 = vmatpush1.xpose.msra.mxu0 0.0
    %776 = vmatprep.subr.mxu0 0.0
    %777 = vmatpush1.xpose.msra.mxu0 0.0
    %778 = vmatprep.subr.mxu0 0.0
    %779 = vmatpush1.xpose.msra.mxu0 0.0
    %780 = vmatprep.subr.mxu0 0.0
    %781 = vmatpush1.xpose.msra.mxu0 0.0
    %782 = vmatprep.subr.mxu0 0.0
    %783 = vmatpush1.xpose.msra.mxu0 0.0
    %784 = vmatprep.subr.mxu0 0.0
    %785 = vmatpush1.xpose.msra.mxu0 0.0
    %786 = vmatprep.subr.mxu0 0.0
    %787 = vmatpush1.xpose.msra.mxu0 0.0
    %788 = vmatprep.subr.mxu0 0.0
    %789 = vmatpush1.xpose.msra.mxu0 0.0
    %790 = vmatprep.subr.mxu0 0.0
    %791 = vmatpush1.xpose.msra.mxu0 0.0
    %792 = vmatprep.subr.mxu0 0.0
    %793 = vmatpush1.xpose.msra.mxu0 0.0
    %794 = vmatprep.subr.mxu0 0.0
    %795 = vmatpush1.xpose.msra.mxu0 0.0
    %796 = vmatprep.subr.mxu0 0.0
    %797 = vmatpush1.xpose.msra.mxu0 0.0
    %798 = vmatprep.subr.mxu0 0.0
    %799 = vmatpush1.xpose.msra.mxu0 0.0
    %800 = vmatprep.subr.mxu0 0.0
    %801 = vmatpush1.xpose.msra.mxu0 0.0
    %802 = vmatprep.mubr.f32.mxu0 0.0
    %803 = vmatmul.mubr.f32.gmra.mrb[0].mxu0 %v734
    %v804 = vpop.f32.mrb[0].mxu0
    %v805 = vadd.f32 0.0, %v804
    %v806 = vpop.f32.mrb[0].mxu0
    %807 = vdwg.mxu0
    %v808 = vsel %vm437, %v394, 0
    %v810 = vsel %vm437, %v408, 0
    %812 = vmatprep.subr.mxu0 0.0
    %813 = vmatpush1.xpose.msra.mxu0 %v810
    %814 = vmatprep.subr.mxu0 0.0
    %815 = vmatpush1.xpose.msra.mxu0 0.0
    %816 = vmatprep.subr.mxu0 0.0
    %817 = vmatpush1.xpose.msra.mxu0 0.0
    %818 = vmatprep.subr.mxu0 0.0
    %819 = vmatpush1.xpose.msra.mxu0 0.0
    %820 = vmatprep.subr.mxu0 0.0
    %821 = vmatpush1.xpose.msra.mxu0 0.0
    %822 = vmatprep.subr.mxu0 0.0
    %823 = vmatpush1.xpose.msra.mxu0 0.0
    %824 = vmatprep.subr.mxu0 0.0
    %825 = vmatpush1.xpose.msra.mxu0 0.0
    %826 = vmatprep.subr.mxu0 0.0
    %827 = vmatpush1.xpose.msra.mxu0 0.0
    %828 = vmatprep.subr.mxu0 0.0
    %829 = vmatpush1.xpose.msra.mxu0 0.0
    %830 = vmatprep.subr.mxu0 0.0
    %831 = vmatpush1.xpose.msra.mxu0 0.0
    %832 = vmatprep.subr.mxu0 0.0
    %833 = vmatpush1.xpose.msra.mxu0 0.0
    %834 = vmatprep.subr.mxu0 0.0
    %835 = vmatpush1.xpose.msra.mxu0 0.0
    %836 = vmatprep.subr.mxu0 0.0
    %837 = vmatpush1.xpose.msra.mxu0 0.0
    %838 = vmatprep.subr.mxu0 0.0
    %839 = vmatpush1.xpose.msra.mxu0 0.0
    %840 = vmatprep.subr.mxu0 0.0
    %841 = vmatpush1.xpose.msra.mxu0 0.0
    %842 = vmatprep.subr.mxu0 0.0
    %843 = vmatpush1.xpose.msra.mxu0 0.0
    %844 = vmatprep.subr.mxu0 0.0
    %845 = vmatpush1.xpose.msra.mxu0 0.0
    %846 = vmatprep.subr.mxu0 0.0
    %847 = vmatpush1.xpose.msra.mxu0 0.0
    %848 = vmatprep.subr.mxu0 0.0
    %849 = vmatpush1.xpose.msra.mxu0 0.0
    %850 = vmatprep.subr.mxu0 0.0
    %851 = vmatpush1.xpose.msra.mxu0 0.0
    %852 = vmatprep.subr.mxu0 0.0
    %853 = vmatpush1.xpose.msra.mxu0 0.0
    %854 = vmatprep.subr.mxu0 0.0
    %855 = vmatpush1.xpose.msra.mxu0 0.0
    %856 = vmatprep.subr.mxu0 0.0
    %857 = vmatpush1.xpose.msra.mxu0 0.0
    %858 = vmatprep.subr.mxu0 0.0
    %859 = vmatpush1.xpose.msra.mxu0 0.0
    %860 = vmatprep.subr.mxu0 0.0
    %861 = vmatpush1.xpose.msra.mxu0 0.0
    %862 = vmatprep.subr.mxu0 0.0
    %863 = vmatpush1.xpose.msra.mxu0 0.0
    %864 = vmatprep.subr.mxu0 0.0
    %865 = vmatpush1.xpose.msra.mxu0 0.0
    %866 = vmatprep.subr.mxu0 0.0
    %867 = vmatpush1.xpose.msra.mxu0 0.0
    %868 = vmatprep.subr.mxu0 0.0
    %869 = vmatpush1.xpose.msra.mxu0 0.0
    %870 = vmatprep.subr.mxu0 0.0
    %871 = vmatpush1.xpose.msra.mxu0 0.0
    %872 = vmatprep.subr.mxu0 0.0
    %873 = vmatpush1.xpose.msra.mxu0 0.0
    %874 = vmatprep.subr.mxu0 0.0
    %875 = vmatpush1.xpose.msra.mxu0 0.0
    %876 = vmatprep.mubr.f32.mxu0 0.0
    %877 = vmatmul.mubr.f32.gmra.mrb[0].mxu0 %v808
    %v878 = vpop.f32.mrb[0].mxu0
    %v879 = vadd.f32 0.0, %v878
    %v880 = vpop.f32.mrb[0].mxu0
    %881 = vdwg.mxu0
    %v882 = vsel %vm437, %v398, 0
    %v884 = vsel %vm437, %v412, 0
    %886 = vmatprep.subr.mxu0 0.0
    %887 = vmatpush1.xpose.msra.mxu0 %v884
    %888 = vmatprep.subr.mxu0 0.0
    %889 = vmatpush1.xpose.msra.mxu0 0.0
    %890 = vmatprep.subr.mxu0 0.0
    %891 = vmatpush1.xpose.msra.mxu0 0.0
    %892 = vmatprep.subr.mxu0 0.0
    %893 = vmatpush1.xpose.msra.mxu0 0.0
    %894 = vmatprep.subr.mxu0 0.0
    %895 = vmatpush1.xpose.msra.mxu0 0.0
    %896 = vmatprep.subr.mxu0 0.0
    %897 = vmatpush1.xpose.msra.mxu0 0.0
    %898 = vmatprep.subr.mxu0 0.0
    %899 = vmatpush1.xpose.msra.mxu0 0.0
    %900 = vmatprep.subr.mxu0 0.0
    %901 = vmatpush1.xpose.msra.mxu0 0.0
    %902 = vmatprep.subr.mxu0 0.0
    %903 = vmatpush1.xpose.msra.mxu0 0.0
    %904 = vmatprep.subr.mxu0 0.0
    %905 = vmatpush1.xpose.msra.mxu0 0.0
    %906 = vmatprep.subr.mxu0 0.0
    %907 = vmatpush1.xpose.msra.mxu0 0.0
    %908 = vmatprep.subr.mxu0 0.0
    %909 = vmatpush1.xpose.msra.mxu0 0.0
    %910 = vmatprep.subr.mxu0 0.0
    %911 = vmatpush1.xpose.msra.mxu0 0.0
    %912 = vmatprep.subr.mxu0 0.0
    %913 = vmatpush1.xpose.msra.mxu0 0.0
    %914 = vmatprep.subr.mxu0 0.0
    %915 = vmatpush1.xpose.msra.mxu0 0.0
    %916 = vmatprep.subr.mxu0 0.0
    %917 = vmatpush1.xpose.msra.mxu0 0.0
    %918 = vmatprep.subr.mxu0 0.0
    %919 = vmatpush1.xpose.msra.mxu0 0.0
    %920 = vmatprep.subr.mxu0 0.0
    %921 = vmatpush1.xpose.msra.mxu0 0.0
    %922 = vmatprep.subr.mxu0 0.0
    %923 = vmatpush1.xpose.msra.mxu0 0.0
    %924 = vmatprep.subr.mxu0 0.0
    %925 = vmatpush1.xpose.msra.mxu0 0.0
    %926 = vmatprep.subr.mxu0 0.0
    %927 = vmatpush1.xpose.msra.mxu0 0.0
    %928 = vmatprep.subr.mxu0 0.0
    %929 = vmatpush1.xpose.msra.mxu0 0.0
    %930 = vmatprep.subr.mxu0 0.0
    %931 = vmatpush1.xpose.msra.mxu0 0.0
    %932 = vmatprep.subr.mxu0 0.0
    %933 = vmatpush1.xpose.msra.mxu0 0.0
    %934 = vmatprep.subr.mxu0 0.0
    %935 = vmatpush1.xpose.msra.mxu0 0.0
    %936 = vmatprep.subr.mxu0 0.0
    %937 = vmatpush1.xpose.msra.mxu0 0.0
    %938 = vmatprep.subr.mxu0 0.0
    %939 = vmatpush1.xpose.msra.mxu0 0.0
    %940 = vmatprep.subr.mxu0 0.0
    %941 = vmatpush1.xpose.msra.mxu0 0.0
    %942 = vmatprep.subr.mxu0 0.0
    %943 = vmatpush1.xpose.msra.mxu0 0.0
    %944 = vmatprep.subr.mxu0 0.0
    %945 = vmatpush1.xpose.msra.mxu0 0.0
    %946 = vmatprep.subr.mxu0 0.0
    %947 = vmatpush1.xpose.msra.mxu0 0.0
    %948 = vmatprep.subr.mxu0 0.0
    %949 = vmatpush1.xpose.msra.mxu0 0.0
    %950 = vmatprep.mubr.f32.mxu0 0.0
    %951 = vmatmul.mubr.f32.gmra.mrb[0].mxu0 %v882
    %v952 = vpop.f32.mrb[0].mxu0
    %v953 = vadd.f32 0.0, %v952
    %v954 = vpop.f32.mrb[0].mxu0
    %955 = vdwg.mxu0
    %v956 = vsel %vm437, %v402, 0
    %v958 = vsel %vm437, %v416, 0
    %960 = vmatprep.subr.mxu0 0.0
    %961 = vmatpush1.xpose.msra.mxu0 %v958
    %962 = vmatprep.subr.mxu0 0.0
    %963 = vmatpush1.xpose.msra.mxu0 0.0
    %964 = vmatprep.subr.mxu0 0.0
    %965 = vmatpush1.xpose.msra.mxu0 0.0
    %966 = vmatprep.subr.mxu0 0.0
    %967 = vmatpush1.xpose.msra.mxu0 0.0
    %968 = vmatprep.subr.mxu0 0.0
    %969 = vmatpush1.xpose.msra.mxu0 0.0
    %970 = vmatprep.subr.mxu0 0.0
    %971 = vmatpush1.xpose.msra.mxu0 0.0
    %972 = vmatprep.subr.mxu0 0.0
    %973 = vmatpush1.xpose.msra.mxu0 0.0
    %974 = vmatprep.subr.mxu0 0.0
    %975 = vmatpush1.xpose.msra.mxu0 0.0
    %976 = vmatprep.subr.mxu0 0.0
    %977 = vmatpush1.xpose.msra.mxu0 0.0
    %978 = vmatprep.subr.mxu0 0.0
    %979 = vmatpush1.xpose.msra.mxu0 0.0
    %980 = vmatprep.subr.mxu0 0.0
    %981 = vmatpush1.xpose.msra.mxu0 0.0
    %982 = vmatprep.subr.mxu0 0.0
    %983 = vmatpush1.xpose.msra.mxu0 0.0
    %984 = vmatprep.subr.mxu0 0.0
    %985 = vmatpush1.xpose.msra.mxu0 0.0
    %986 = vmatprep.subr.mxu0 0.0
    %987 = vmatpush1.xpose.msra.mxu0 0.0
    %988 = vmatprep.subr.mxu0 0.0
    %989 = vmatpush1.xpose.msra.mxu0 0.0
    %990 = vmatprep.subr.mxu0 0.0
    %991 = vmatpush1.xpose.msra.mxu0 0.0
    %992 = vmatprep.subr.mxu0 0.0
    %993 = vmatpush1.xpose.msra.mxu0 0.0
    %994 = vmatprep.subr.mxu0 0.0
    %995 = vmatpush1.xpose.msra.mxu0 0.0
    %996 = vmatprep.subr.mxu0 0.0
    %997 = vmatpush1.xpose.msra.mxu0 0.0
    %998 = vmatprep.subr.mxu0 0.0
    %999 = vmatpush1.xpose.msra.mxu0 0.0
    %1000 = vmatprep.subr.mxu0 0.0
    %1001 = vmatpush1.xpose.msra.mxu0 0.0
    %1002 = vmatprep.subr.mxu0 0.0
    %1003 = vmatpush1.xpose.msra.mxu0 0.0
    %1004 = vmatprep.subr.mxu0 0.0
    %1005 = vmatpush1.xpose.msra.mxu0 0.0
    %1006 = vmatprep.subr.mxu0 0.0
    %1007 = vmatpush1.xpose.msra.mxu0 0.0
    %1008 = vmatprep.subr.mxu0 0.0
    %1009 = vmatpush1.xpose.msra.mxu0 0.0
    %1010 = vmatprep.subr.mxu0 0.0
    %1011 = vmatpush1.xpose.msra.mxu0 0.0
    %1012 = vmatprep.subr.mxu0 0.0
    %1013 = vmatpush1.xpose.msra.mxu0 0.0
    %1014 = vmatprep.subr.mxu0 0.0
    %1015 = vmatpush1.xpose.msra.mxu0 0.0
    %1016 = vmatprep.subr.mxu0 0.0
    %1017 = vmatpush1.xpose.msra.mxu0 0.0
    %1018 = vmatprep.subr.mxu0 0.0
    %1019 = vmatpush1.xpose.msra.mxu0 0.0
    %1020 = vmatprep.subr.mxu0 0.0
    %1021 = vmatpush1.xpose.msra.mxu0 0.0
    %1022 = vmatprep.subr.mxu0 0.0
    %1023 = vmatpush1.xpose.msra.mxu0 0.0
    %1024 = vmatprep.mubr.f32.mxu0 0.0
    %1025 = vmatmul.mubr.f32.gmra.mrb[0].mxu0 %v956
    %v1026 = vpop.f32.mrb[0].mxu0
    %v1027 = vadd.f32 0.0, %v1026
    %v1028 = vpop.f32.mrb[0].mxu0
    %1029 = vdwg.mxu0
    %v1030 = vld [vmem:[%s3] sm:$0x3]
    %v1031 = vld [vmem:[%s3 + $0x2] sm:$0x3]
    %vm1032 = vnez %v1030
    %vm1033 = vnez %v1031
    %v1034 = vsel %vm1032, 16843009, 0
    %v1035 = vsel %vm1033, 16843009, 0
    %v1036 = vunpack.c.0.s8 %v1034
    %v1037 = vunpack.c.0.s8 %v1035
    %vm1038 = vcmp.ne.s32.totalorder %v1036, 0
    %vm1039 = vcmp.ne.s32.totalorder %v1037, 0
    %v1040 = vsel %vm1038, 1, 0
    %v1041 = vsel %vm1039, 1, 0
    %vm1042 = vcmp.eq.s32.totalorder %v1040, 1
    %vm1043 = vcmp.eq.s32.totalorder %v1041, 1
    %v1044 = vsel %vm1042, %v509, -1e+09
    %v1045 = vsel %vm1042, %v583, -1e+09
    %v1046 = vsel %vm1042, %v657, -1e+09
    %v1047 = vsel %vm1042, %v731, -1e+09
    %v1048 = vsel %vm1043, %v805, -1e+09
    %v1049 = vsel %vm1043, %v879, -1e+09
    %v1050 = vsel %vm1043, %v953, -1e+09
    %v1051 = vsel %vm1043, %v1027, -1e+09
    %v1052 = vsel %vm437, %v1044, -inf
    %1053 = vmax.xlane.f32.xlu0 %v1052
    %v1054 = vpop.xlane.xlu0 %1053
    %v1055 = vsel %vm437, %v1045, -inf
    %1056 = vmax.xlane.f32.xlu0 %v1055
    %v1057 = vpop.xlane.xlu0 %1056
    %v1058 = vsel %vm437, %v1046, -inf
    %1059 = vmax.xlane.f32.xlu0 %v1058
    %v1060 = vpop.xlane.xlu0 %1059
    %v1061 = vsel %vm437, %v1047, -inf
    %1062 = vmax.xlane.f32.xlu0 %v1061
    %v1063 = vpop.xlane.xlu0 %1062
    %v1064 = vsel %vm437, %v1048, -inf
    %1065 = vmax.xlane.f32.xlu0 %v1064
    %v1066 = vpop.xlane.xlu0 %1065
    %v1067 = vsel %vm437, %v1049, -inf
    %1068 = vmax.xlane.f32.xlu0 %v1067
    %v1069 = vpop.xlane.xlu0 %1068
    %v1070 = vsel %vm437, %v1050, -inf
    %1071 = vmax.xlane.f32.xlu0 %v1070
    %v1072 = vpop.xlane.xlu0 %1071
    %v1073 = vsel %vm437, %v1051, -inf
    %1074 = vmax.xlane.f32.xlu0 %v1073
    %v1075 = vpop.xlane.xlu0 %1074
    %v1076 = vsub.f32 %v1044, %v1054
    %v1077 = vsub.f32 %v1045, %v1057
    %v1078 = vsub.f32 %v1046, %v1060
    %v1079 = vsub.f32 %v1047, %v1063
    %v1080 = vsub.f32 %v1048, %v1066
    %v1081 = vsub.f32 %v1049, %v1069
    %v1082 = vsub.f32 %v1050, %v1072
    %v1083 = vsub.f32 %v1051, %v1075
    %v1084 = vmul.f32 %v1076, 1.442695
    %v1085 = vpow.pop %v1084
    %v1086 = vmul.f32 %v1077, 1.442695
    %v1087 = vpow.pop %v1086
    %v1088 = vmul.f32 %v1078, 1.442695
    %v1089 = vpow.pop %v1088
    %v1090 = vmul.f32 %v1079, 1.442695
    %v1091 = vpow.pop %v1090
    %v1092 = vmul.f32 %v1080, 1.442695
    %v1093 = vpow.pop %v1092
    %v1094 = vmul.f32 %v1081, 1.442695
    %v1095 = vpow.pop %v1094
    %v1096 = vmul.f32 %v1082, 1.442695
    %v1097 = vpow.pop %v1096
    %v1098 = vmul.f32 %v1083, 1.442695
    %v1099 = vpow.pop %v1098
    %v1100 = vsel %vm437, %v1085, 0.0
    %1101 = vadd.xlane.f32.xlu0 %v1100
    %v1102 = vpop.xlane.xlu0 %1101
    %v1103 = vsel %vm437, %v1087, 0.0
    %1104 = vadd.xlane.f32.xlu0 %v1103
    %v1105 = vpop.xlane.xlu0 %1104
    %v1106 = vsel %vm437, %v1089, 0.0
    %1107 = vadd.xlane.f32.xlu0 %v1106
    %v1108 = vpop.xlane.xlu0 %1107
    %v1109 = vsel %vm437, %v1091, 0.0
    %1110 = vadd.xlane.f32.xlu0 %v1109
    %v1111 = vpop.xlane.xlu0 %1110
    %v1112 = vsel %vm437, %v1093, 0.0
    %1113 = vadd.xlane.f32.xlu0 %v1112
    %v1114 = vpop.xlane.xlu0 %1113
    %v1115 = vsel %vm437, %v1095, 0.0
    %1116 = vadd.xlane.f32.xlu0 %v1115
    %v1117 = vpop.xlane.xlu0 %1116
    %v1118 = vsel %vm437, %v1097, 0.0
    %1119 = vadd.xlane.f32.xlu0 %v1118
    %v1120 = vpop.xlane.xlu0 %1119
    %v1121 = vsel %vm437, %v1099, 0.0
    %1122 = vadd.xlane.f32.xlu0 %v1121
    %v1123 = vpop.xlane.xlu0 %1122
    %v1124 = vrcp.pop %v1102
    %v1125 = vrcp.pop %v1105
    %v1126 = vrcp.pop %v1108
    %v1127 = vrcp.pop %v1111
    %v1128 = vrcp.pop %v1114
    %v1129 = vrcp.pop %v1117
    %v1130 = vrcp.pop %v1120
    %v1131 = vrcp.pop %v1123
    %v1132 = vmul.f32 %v1085, %v1124
    %v1133 = vmul.f32 %v1087, %v1125
    %v1134 = vmul.f32 %v1089, %v1126
    %v1135 = vmul.f32 %v1091, %v1127
    %v1136 = vmul.f32 %v1093, %v1128
    %v1137 = vmul.f32 %v1095, %v1129
    %v1138 = vmul.f32 %v1097, %v1130
    %v1139 = vmul.f32 %v1099, %v1131
    %v1141 = vsel %vm437, %v1132, 0
    %1143 = vmatprep.subr.mxu0 0.0
    %1144 = vmatpush1.msra.mxu0 %v381
    %1145 = vmatprep.subr.mxu0 0.0
    %1146 = vmatpush1.msra.mxu0 0.0
    %1147 = vmatprep.subr.mxu0 0.0
    %1148 = vmatpush1.msra.mxu0 0.0
    %1149 = vmatprep.subr.mxu0 0.0
    %1150 = vmatpush1.msra.mxu0 0.0
    %1151 = vmatprep.subr.mxu0 0.0
    %1152 = vmatpush1.msra.mxu0 0.0
    %1153 = vmatprep.subr.mxu0 0.0
    %1154 = vmatpush1.msra.mxu0 0.0
    %1155 = vmatprep.subr.mxu0 0.0
    %1156 = vmatpush1.msra.mxu0 0.0
    %1157 = vmatprep.subr.mxu0 0.0
    %1158 = vmatpush1.msra.mxu0 0.0
    %1159 = vmatprep.subr.mxu0 0.0
    %1160 = vmatpush1.msra.mxu0 0.0
    %1161 = vmatprep.subr.mxu0 0.0
    %1162 = vmatpush1.msra.mxu0 0.0
    %1163 = vmatprep.subr.mxu0 0.0
    %1164 = vmatpush1.msra.mxu0 0.0
    %1165 = vmatprep.subr.mxu0 0.0
    %1166 = vmatpush1.msra.mxu0 0.0
    %1167 = vmatprep.subr.mxu0 0.0
    %1168 = vmatpush1.msra.mxu0 0.0
    %1169 = vmatprep.subr.mxu0 0.0
    %1170 = vmatpush1.msra.mxu0 0.0
    %1171 = vmatprep.subr.mxu0 0.0
    %1172 = vmatpush1.msra.mxu0 0.0
    %1173 = vmatprep.subr.mxu0 0.0
    %1174 = vmatpush1.msra.mxu0 0.0
    %1175 = vmatprep.subr.mxu0 0.0
    %1176 = vmatpush1.msra.mxu0 0.0
    %1177 = vmatprep.subr.mxu0 0.0
    %1178 = vmatpush1.msra.mxu0 0.0
    %1179 = vmatprep.subr.mxu0 0.0
    %1180 = vmatpush1.msra.mxu0 0.0
    %1181 = vmatprep.subr.mxu0 0.0
    %1182 = vmatpush1.msra.mxu0 0.0
    %1183 = vmatprep.subr.mxu0 0.0
    %1184 = vmatpush1.msra.mxu0 0.0
    %1185 = vmatprep.subr.mxu0 0.0
    %1186 = vmatpush1.msra.mxu0 0.0
    %1187 = vmatprep.subr.mxu0 0.0
    %1188 = vmatpush1.msra.mxu0 0.0
    %1189 = vmatprep.subr.mxu0 0.0
    %1190 = vmatpush1.msra.mxu0 0.0
    %1191 = vmatprep.subr.mxu0 0.0
    %1192 = vmatpush1.msra.mxu0 0.0
    %1193 = vmatprep.subr.mxu0 0.0
    %1194 = vmatpush1.msra.mxu0 0.0
    %1195 = vmatprep.subr.mxu0 0.0
    %1196 = vmatpush1.msra.mxu0 0.0
    %1197 = vmatprep.subr.mxu0 0.0
    %1198 = vmatpush1.msra.mxu0 0.0
    %1199 = vmatprep.subr.mxu0 0.0
    %1200 = vmatpush1.msra.mxu0 0.0
    %1201 = vmatprep.subr.mxu0 0.0
    %1202 = vmatpush1.msra.mxu0 0.0
    %1203 = vmatprep.subr.mxu0 0.0
    %1204 = vmatpush1.msra.mxu0 0.0
    %1205 = vmatprep.subr.mxu0 0.0
    %1206 = vmatpush1.msra.mxu0 0.0
    %1207 = vmatprep.mubr.f32.mxu0 0.0
    %1208 = vmatmul.mubr.f32.gmra.mrb[0].mxu0 %v1141
    %v1209 = vpop.f32.mrb[0].mxu0
    %v1210 = vadd.f32 0.0, %v1209
    %v1211 = vpop.f32.mrb[0].mxu0
    %1212 = vdwg.mxu0
    %v1214 = vsel %vm437, %v1133, 0
    %1216 = vmatprep.subr.mxu0 0.0
    %1217 = vmatpush1.msra.mxu0 %v420
    %1218 = vmatprep.subr.mxu0 0.0
    %1219 = vmatpush1.msra.mxu0 0.0
    %1220 = vmatprep.subr.mxu0 0.0
    %1221 = vmatpush1.msra.mxu0 0.0
    %1222 = vmatprep.subr.mxu0 0.0
    %1223 = vmatpush1.msra.mxu0 0.0
    %1224 = vmatprep.subr.mxu0 0.0
    %1225 = vmatpush1.msra.mxu0 0.0
    %1226 = vmatprep.subr.mxu0 0.0
    %1227 = vmatpush1.msra.mxu0 0.0
    %1228 = vmatprep.subr.mxu0 0.0
    %1229 = vmatpush1.msra.mxu0 0.0
    %1230 = vmatprep.subr.mxu0 0.0
    %1231 = vmatpush1.msra.mxu0 0.0
    %1232 = vmatprep.subr.mxu0 0.0
    %1233 = vmatpush1.msra.mxu0 0.0
    %1234 = vmatprep.subr.mxu0 0.0
    %1235 = vmatpush1.msra.mxu0 0.0
    %1236 = vmatprep.subr.mxu0 0.0
    %1237 = vmatpush1.msra.mxu0 0.0
    %1238 = vmatprep.subr.mxu0 0.0
    %1239 = vmatpush1.msra.mxu0 0.0
    %1240 = vmatprep.subr.mxu0 0.0
    %1241 = vmatpush1.msra.mxu0 0.0
    %1242 = vmatprep.subr.mxu0 0.0
    %1243 = vmatpush1.msra.mxu0 0.0
    %1244 = vmatprep.subr.mxu0 0.0
    %1245 = vmatpush1.msra.mxu0 0.0
    %1246 = vmatprep.subr.mxu0 0.0
    %1247 = vmatpush1.msra.mxu0 0.0
    %1248 = vmatprep.subr.mxu0 0.0
    %1249 = vmatpush1.msra.mxu0 0.0
    %1250 = vmatprep.subr.mxu0 0.0
    %1251 = vmatpush1.msra.mxu0 0.0
    %1252 = vmatprep.subr.mxu0 0.0
    %1253 = vmatpush1.msra.mxu0 0.0
    %1254 = vmatprep.subr.mxu0 0.0
    %1255 = vmatpush1.msra.mxu0 0.0
    %1256 = vmatprep.subr.mxu0 0.0
    %1257 = vmatpush1.msra.mxu0 0.0
    %1258 = vmatprep.subr.mxu0 0.0
    %1259 = vmatpush1.msra.mxu0 0.0
    %1260 = vmatprep.subr.mxu0 0.0
    %1261 = vmatpush1.msra.mxu0 0.0
    %1262 = vmatprep.subr.mxu0 0.0
    %1263 = vmatpush1.msra.mxu0 0.0
    %1264 = vmatprep.subr.mxu0 0.0
    %1265 = vmatpush1.msra.mxu0 0.0
    %1266 = vmatprep.subr.mxu0 0.0
    %1267 = vmatpush1.msra.mxu0 0.0
    %1268 = vmatprep.subr.mxu0 0.0
    %1269 = vmatpush1.msra.mxu0 0.0
    %1270 = vmatprep.subr.mxu0 0.0
    %1271 = vmatpush1.msra.mxu0 0.0
    %1272 = vmatprep.subr.mxu0 0.0
    %1273 = vmatpush1.msra.mxu0 0.0
    %1274 = vmatprep.subr.mxu0 0.0
    %1275 = vmatpush1.msra.mxu0 0.0
    %1276 = vmatprep.subr.mxu0 0.0
    %1277 = vmatpush1.msra.mxu0 0.0
    %1278 = vmatprep.subr.mxu0 0.0
    %1279 = vmatpush1.msra.mxu0 0.0
    %1280 = vmatprep.mubr.f32.mxu0 0.0
    %1281 = vmatmul.mubr.f32.gmra.mrb[0].mxu0 %v1214
    %v1282 = vpop.f32.mrb[0].mxu0
    %v1283 = vadd.f32 0.0, %v1282
    %v1284 = vpop.f32.mrb[0].mxu0
    %1285 = vdwg.mxu0
    %v1287 = vsel %vm437, %v1134, 0
    %1289 = vmatprep.subr.mxu0 0.0
    %1290 = vmatpush1.msra.mxu0 %v426
    %1291 = vmatprep.subr.mxu0 0.0
    %1292 = vmatpush1.msra.mxu0 0.0
    %1293 = vmatprep.subr.mxu0 0.0
    %1294 = vmatpush1.msra.mxu0 0.0
    %1295 = vmatprep.subr.mxu0 0.0
    %1296 = vmatpush1.msra.mxu0 0.0
    %1297 = vmatprep.subr.mxu0 0.0
    %1298 = vmatpush1.msra.mxu0 0.0
    %1299 = vmatprep.subr.mxu0 0.0
    %1300 = vmatpush1.msra.mxu0 0.0
    %1301 = vmatprep.subr.mxu0 0.0
    %1302 = vmatpush1.msra.mxu0 0.0
    %1303 = vmatprep.subr.mxu0 0.0
    %1304 = vmatpush1.msra.mxu0 0.0
    %1305 = vmatprep.subr.mxu0 0.0
    %1306 = vmatpush1.msra.mxu0 0.0
    %1307 = vmatprep.subr.mxu0 0.0
    %1308 = vmatpush1.msra.mxu0 0.0
    %1309 = vmatprep.subr.mxu0 0.0
    %1310 = vmatpush1.msra.mxu0 0.0
    %1311 = vmatprep.subr.mxu0 0.0
    %1312 = vmatpush1.msra.mxu0 0.0
    %1313 = vmatprep.subr.mxu0 0.0
    %1314 = vmatpush1.msra.mxu0 0.0
    %1315 = vmatprep.subr.mxu0 0.0
    %1316 = vmatpush1.msra.mxu0 0.0
    %1317 = vmatprep.subr.mxu0 0.0
    %1318 = vmatpush1.msra.mxu0 0.0
    %1319 = vmatprep.subr.mxu0 0.0
    %1320 = vmatpush1.msra.mxu0 0.0
    %1321 = vmatprep.subr.mxu0 0.0
    %1322 = vmatpush1.msra.mxu0 0.0
    %1323 = vmatprep.subr.mxu0 0.0
    %1324 = vmatpush1.msra.mxu0 0.0
    %1325 = vmatprep.subr.mxu0 0.0
    %1326 = vmatpush1.msra.mxu0 0.0
    %1327 = vmatprep.subr.mxu0 0.0
    %1328 = vmatpush1.msra.mxu0 0.0
    %1329 = vmatprep.subr.mxu0 0.0
    %1330 = vmatpush1.msra.mxu0 0.0
    %1331 = vmatprep.subr.mxu0 0.0
    %1332 = vmatpush1.msra.mxu0 0.0
    %1333 = vmatprep.subr.mxu0 0.0
    %1334 = vmatpush1.msra.mxu0 0.0
    %1335 = vmatprep.subr.mxu0 0.0
    %1336 = vmatpush1.msra.mxu0 0.0
    %1337 = vmatprep.subr.mxu0 0.0
    %1338 = vmatpush1.msra.mxu0 0.0
    %1339 = vmatprep.subr.mxu0 0.0
    %1340 = vmatpush1.msra.mxu0 0.0
    %1341 = vmatprep.subr.mxu0 0.0
    %1342 = vmatpush1.msra.mxu0 0.0
    %1343 = vmatprep.subr.mxu0 0.0
    %1344 = vmatpush1.msra.mxu0 0.0
    %1345 = vmatprep.subr.mxu0 0.0
    %1346 = vmatpush1.msra.mxu0 0.0
    %1347 = vmatprep.subr.mxu0 0.0
    %1348 = vmatpush1.msra.mxu0 0.0
    %1349 = vmatprep.subr.mxu0 0.0
    %1350 = vmatpush1.msra.mxu0 0.0
    %1351 = vmatprep.subr.mxu0 0.0
    %1352 = vmatpush1.msra.mxu0 0.0
    %1353 = vmatprep.mubr.f32.mxu0 0.0
    %1354 = vmatmul.mubr.f32.gmra.mrb[0].mxu0 %v1287
    %v1355 = vpop.f32.mrb[0].mxu0
    %v1356 = vadd.f32 0.0, %v1355
    %v1357 = vpop.f32.mrb[0].mxu0
    %1358 = vdwg.mxu0
    %v1360 = vsel %vm437, %v1135, 0
    %1362 = vmatprep.subr.mxu0 0.0
    %1363 = vmatpush1.msra.mxu0 %v432
    %1364 = vmatprep.subr.mxu0 0.0
    %1365 = vmatpush1.msra.mxu0 0.0
    %1366 = vmatprep.subr.mxu0 0.0
    %1367 = vmatpush1.msra.mxu0 0.0
    %1368 = vmatprep.subr.mxu0 0.0
    %1369 = vmatpush1.msra.mxu0 0.0
    %1370 = vmatprep.subr.mxu0 0.0
    %1371 = vmatpush1.msra.mxu0 0.0
    %1372 = vmatprep.subr.mxu0 0.0
    %1373 = vmatpush1.msra.mxu0 0.0
    %1374 = vmatprep.subr.mxu0 0.0
    %1375 = vmatpush1.msra.mxu0 0.0
    %1376 = vmatprep.subr.mxu0 0.0
    %1377 = vmatpush1.msra.mxu0 0.0
    %1378 = vmatprep.subr.mxu0 0.0
    %1379 = vmatpush1.msra.mxu0 0.0
    %1380 = vmatprep.subr.mxu0 0.0
    %1381 = vmatpush1.msra.mxu0 0.0
    %1382 = vmatprep.subr.mxu0 0.0
    %1383 = vmatpush1.msra.mxu0 0.0
    %1384 = vmatprep.subr.mxu0 0.0
    %1385 = vmatpush1.msra.mxu0 0.0
    %1386 = vmatprep.subr.mxu0 0.0
    %1387 = vmatpush1.msra.mxu0 0.0
    %1388 = vmatprep.subr.mxu0 0.0
    %1389 = vmatpush1.msra.mxu0 0.0
    %1390 = vmatprep.subr.mxu0 0.0
    %1391 = vmatpush1.msra.mxu0 0.0
    %1392 = vmatprep.subr.mxu0 0.0
    %1393 = vmatpush1.msra.mxu0 0.0
    %1394 = vmatprep.subr.mxu0 0.0
    %1395 = vmatpush1.msra.mxu0 0.0
    %1396 = vmatprep.subr.mxu0 0.0
    %1397 = vmatpush1.msra.mxu0 0.0
    %1398 = vmatprep.subr.mxu0 0.0
    %1399 = vmatpush1.msra.mxu0 0.0
    %1400 = vmatprep.subr.mxu0 0.0
    %1401 = vmatpush1.msra.mxu0 0.0
    %1402 = vmatprep.subr.mxu0 0.0
    %1403 = vmatpush1.msra.mxu0 0.0
    %1404 = vmatprep.subr.mxu0 0.0
    %1405 = vmatpush1.msra.mxu0 0.0
    %1406 = vmatprep.subr.mxu0 0.0
    %1407 = vmatpush1.msra.mxu0 0.0
    %1408 = vmatprep.subr.mxu0 0.0
    %1409 = vmatpush1.msra.mxu0 0.0
    %1410 = vmatprep.subr.mxu0 0.0
    %1411 = vmatpush1.msra.mxu0 0.0
    %1412 = vmatprep.subr.mxu0 0.0
    %1413 = vmatpush1.msra.mxu0 0.0
    %1414 = vmatprep.subr.mxu0 0.0
    %1415 = vmatpush1.msra.mxu0 0.0
    %1416 = vmatprep.subr.mxu0 0.0
    %1417 = vmatpush1.msra.mxu0 0.0
    %1418 = vmatprep.subr.mxu0 0.0
    %1419 = vmatpush1.msra.mxu0 0.0
    %1420 = vmatprep.subr.mxu0 0.0
    %1421 = vmatpush1.msra.mxu0 0.0
    %1422 = vmatprep.subr.mxu0 0.0
    %1423 = vmatpush1.msra.mxu0 0.0
    %1424 = vmatprep.subr.mxu0 0.0
    %1425 = vmatpush1.msra.mxu0 0.0
    %1426 = vmatprep.mubr.f32.mxu0 0.0
    %1427 = vmatmul.mubr.f32.gmra.mrb[0].mxu0 %v1360
    %v1428 = vpop.f32.mrb[0].mxu0
    %v1429 = vadd.f32 0.0, %v1428
    %v1430 = vpop.f32.mrb[0].mxu0
    %1431 = vdwg.mxu0
    %v1433 = vsel %vm437, %v1136, 0
    %1435 = vmatprep.subr.mxu0 0.0
    %1436 = vmatpush1.msra.mxu0 %v386
    %1437 = vmatprep.subr.mxu0 0.0
    %1438 = vmatpush1.msra.mxu0 0.0
    %1439 = vmatprep.subr.mxu0 0.0
    %1440 = vmatpush1.msra.mxu0 0.0
    %1441 = vmatprep.subr.mxu0 0.0
    %1442 = vmatpush1.msra.mxu0 0.0
    %1443 = vmatprep.subr.mxu0 0.0
    %1444 = vmatpush1.msra.mxu0 0.0
    %1445 = vmatprep.subr.mxu0 0.0
    %1446 = vmatpush1.msra.mxu0 0.0
    %1447 = vmatprep.subr.mxu0 0.0
    %1448 = vmatpush1.msra.mxu0 0.0
    %1449 = vmatprep.subr.mxu0 0.0
    %1450 = vmatpush1.msra.mxu0 0.0
    %1451 = vmatprep.subr.mxu0 0.0
    %1452 = vmatpush1.msra.mxu0 0.0
    %1453 = vmatprep.subr.mxu0 0.0
    %1454 = vmatpush1.msra.mxu0 0.0
    %1455 = vmatprep.subr.mxu0 0.0
    %1456 = vmatpush1.msra.mxu0 0.0
    %1457 = vmatprep.subr.mxu0 0.0
    %1458 = vmatpush1.msra.mxu0 0.0
    %1459 = vmatprep.subr.mxu0 0.0
    %1460 = vmatpush1.msra.mxu0 0.0
    %1461 = vmatprep.subr.mxu0 0.0
    %1462 = vmatpush1.msra.mxu0 0.0
    %1463 = vmatprep.subr.mxu0 0.0
    %1464 = vmatpush1.msra.mxu0 0.0
    %1465 = vmatprep.subr.mxu0 0.0
    %1466 = vmatpush1.msra.mxu0 0.0
    %1467 = vmatprep.subr.mxu0 0.0
    %1468 = vmatpush1.msra.mxu0 0.0
    %1469 = vmatprep.subr.mxu0 0.0
    %1470 = vmatpush1.msra.mxu0 0.0
    %1471 = vmatprep.subr.mxu0 0.0
    %1472 = vmatpush1.msra.mxu0 0.0
    %1473 = vmatprep.subr.mxu0 0.0
    %1474 = vmatpush1.msra.mxu0 0.0
    %1475 = vmatprep.subr.mxu0 0.0
    %1476 = vmatpush1.msra.mxu0 0.0
    %1477 = vmatprep.subr.mxu0 0.0
    %1478 = vmatpush1.msra.mxu0 0.0
    %1479 = vmatprep.subr.mxu0 0.0
    %1480 = vmatpush1.msra.mxu0 0.0
    %1481 = vmatprep.subr.mxu0 0.0
    %1482 = vmatpush1.msra.mxu0 0.0
    %1483 = vmatprep.subr.mxu0 0.0
    %1484 = vmatpush1.msra.mxu0 0.0
    %1485 = vmatprep.subr.mxu0 0.0
    %1486 = vmatpush1.msra.mxu0 0.0
    %1487 = vmatprep.subr.mxu0 0.0
    %1488 = vmatpush1.msra.mxu0 0.0
    %1489 = vmatprep.subr.mxu0 0.0
    %1490 = vmatpush1.msra.mxu0 0.0
    %1491 = vmatprep.subr.mxu0 0.0
    %1492 = vmatpush1.msra.mxu0 0.0
    %1493 = vmatprep.subr.mxu0 0.0
    %1494 = vmatpush1.msra.mxu0 0.0
    %1495 = vmatprep.subr.mxu0 0.0
    %1496 = vmatpush1.msra.mxu0 0.0
    %1497 = vmatprep.subr.mxu0 0.0
    %1498 = vmatpush1.msra.mxu0 0.0
    %1499 = vmatprep.mubr.f32.mxu0 0.0
    %1500 = vmatmul.mubr.f32.gmra.mrb[0].mxu0 %v1433
    %v1501 = vpop.f32.mrb[0].mxu0
    %v1502 = vadd.f32 0.0, %v1501
    %v1503 = vpop.f32.mrb[0].mxu0
    %1504 = vdwg.mxu0
    %v1506 = vsel %vm437, %v1137, 0
    %1508 = vmatprep.subr.mxu0 0.0
    %1509 = vmatpush1.msra.mxu0 %v422
    %1510 = vmatprep.subr.mxu0 0.0
    %1511 = vmatpush1.msra.mxu0 0.0
    %1512 = vmatprep.subr.mxu0 0.0
    %1513 = vmatpush1.msra.mxu0 0.0
    %1514 = vmatprep.subr.mxu0 0.0
    %1515 = vmatpush1.msra.mxu0 0.0
    %1516 = vmatprep.subr.mxu0 0.0
    %1517 = vmatpush1.msra.mxu0 0.0
    %1518 = vmatprep.subr.mxu0 0.0
    %1519 = vmatpush1.msra.mxu0 0.0
    %1520 = vmatprep.subr.mxu0 0.0
    %1521 = vmatpush1.msra.mxu0 0.0
    %1522 = vmatprep.subr.mxu0 0.0
    %1523 = vmatpush1.msra.mxu0 0.0
    %1524 = vmatprep.subr.mxu0 0.0
    %1525 = vmatpush1.msra.mxu0 0.0
    %1526 = vmatprep.subr.mxu0 0.0
    %1527 = vmatpush1.msra.mxu0 0.0
    %1528 = vmatprep.subr.mxu0 0.0
    %1529 = vmatpush1.msra.mxu0 0.0
    %1530 = vmatprep.subr.mxu0 0.0
    %1531 = vmatpush1.msra.mxu0 0.0
    %1532 = vmatprep.subr.mxu0 0.0
    %1533 = vmatpush1.msra.mxu0 0.0
    %1534 = vmatprep.subr.mxu0 0.0
    %1535 = vmatpush1.msra.mxu0 0.0
    %1536 = vmatprep.subr.mxu0 0.0
    %1537 = vmatpush1.msra.mxu0 0.0
    %1538 = vmatprep.subr.mxu0 0.0
    %1539 = vmatpush1.msra.mxu0 0.0
    %1540 = vmatprep.subr.mxu0 0.0
    %1541 = vmatpush1.msra.mxu0 0.0
    %1542 = vmatprep.subr.mxu0 0.0
    %1543 = vmatpush1.msra.mxu0 0.0
    %1544 = vmatprep.subr.mxu0 0.0
    %1545 = vmatpush1.msra.mxu0 0.0
    %1546 = vmatprep.subr.mxu0 0.0
    %1547 = vmatpush1.msra.mxu0 0.0
    %1548 = vmatprep.subr.mxu0 0.0
    %1549 = vmatpush1.msra.mxu0 0.0
    %1550 = vmatprep.subr.mxu0 0.0
    %1551 = vmatpush1.msra.mxu0 0.0
    %1552 = vmatprep.subr.mxu0 0.0
    %1553 = vmatpush1.msra.mxu0 0.0
    %1554 = vmatprep.subr.mxu0 0.0
    %1555 = vmatpush1.msra.mxu0 0.0
    %1556 = vmatprep.subr.mxu0 0.0
    %1557 = vmatpush1.msra.mxu0 0.0
    %1558 = vmatprep.subr.mxu0 0.0
    %1559 = vmatpush1.msra.mxu0 0.0
    %1560 = vmatprep.subr.mxu0 0.0
    %1561 = vmatpush1.msra.mxu0 0.0
    %1562 = vmatprep.subr.mxu0 0.0
    %1563 = vmatpush1.msra.mxu0 0.0
    %1564 = vmatprep.subr.mxu0 0.0
    %1565 = vmatpush1.msra.mxu0 0.0
    %1566 = vmatprep.subr.mxu0 0.0
    %1567 = vmatpush1.msra.mxu0 0.0
    %1568 = vmatprep.subr.mxu0 0.0
    %1569 = vmatpush1.msra.mxu0 0.0
    %1570 = vmatprep.subr.mxu0 0.0
    %1571 = vmatpush1.msra.mxu0 0.0
    %1572 = vmatprep.mubr.f32.mxu0 0.0
    %1573 = vmatmul.mubr.f32.gmra.mrb[0].mxu0 %v1506
    %v1574 = vpop.f32.mrb[0].mxu0
    %v1575 = vadd.f32 0.0, %v1574
    %v1576 = vpop.f32.mrb[0].mxu0
    %1577 = vdwg.mxu0
    %v1579 = vsel %vm437, %v1138, 0
    %1581 = vmatprep.subr.mxu0 0.0
    %1582 = vmatpush1.msra.mxu0 %v428
    %1583 = vmatprep.subr.mxu0 0.0
    %1584 = vmatpush1.msra.mxu0 0.0
    %1585 = vmatprep.subr.mxu0 0.0
    %1586 = vmatpush1.msra.mxu0 0.0
    %1587 = vmatprep.subr.mxu0 0.0
    %1588 = vmatpush1.msra.mxu0 0.0
    %1589 = vmatprep.subr.mxu0 0.0
    %1590 = vmatpush1.msra.mxu0 0.0
    %1591 = vmatprep.subr.mxu0 0.0
    %1592 = vmatpush1.msra.mxu0 0.0
    %1593 = vmatprep.subr.mxu0 0.0
    %1594 = vmatpush1.msra.mxu0 0.0
    %1595 = vmatprep.subr.mxu0 0.0
    %1596 = vmatpush1.msra.mxu0 0.0
    %1597 = vmatprep.subr.mxu0 0.0
    %1598 = vmatpush1.msra.mxu0 0.0
    %1599 = vmatprep.subr.mxu0 0.0
    %1600 = vmatpush1.msra.mxu0 0.0
    %1601 = vmatprep.subr.mxu0 0.0
    %1602 = vmatpush1.msra.mxu0 0.0
    %1603 = vmatprep.subr.mxu0 0.0
    %1604 = vmatpush1.msra.mxu0 0.0
    %1605 = vmatprep.subr.mxu0 0.0
    %1606 = vmatpush1.msra.mxu0 0.0
    %1607 = vmatprep.subr.mxu0 0.0
    %1608 = vmatpush1.msra.mxu0 0.0
    %1609 = vmatprep.subr.mxu0 0.0
    %1610 = vmatpush1.msra.mxu0 0.0
    %1611 = vmatprep.subr.mxu0 0.0
    %1612 = vmatpush1.msra.mxu0 0.0
    %1613 = vmatprep.subr.mxu0 0.0
    %1614 = vmatpush1.msra.mxu0 0.0
    %1615 = vmatprep.subr.mxu0 0.0
    %1616 = vmatpush1.msra.mxu0 0.0
    %1617 = vmatprep.subr.mxu0 0.0
    %1618 = vmatpush1.msra.mxu0 0.0
    %1619 = vmatprep.subr.mxu0 0.0
    %1620 = vmatpush1.msra.mxu0 0.0
    %1621 = vmatprep.subr.mxu0 0.0
    %1622 = vmatpush1.msra.mxu0 0.0
    %1623 = vmatprep.subr.mxu0 0.0
    %1624 = vmatpush1.msra.mxu0 0.0
    %1625 = vmatprep.subr.mxu0 0.0
    %1626 = vmatpush1.msra.mxu0 0.0
    %1627 = vmatprep.subr.mxu0 0.0
    %1628 = vmatpush1.msra.mxu0 0.0
    %1629 = vmatprep.subr.mxu0 0.0
    %1630 = vmatpush1.msra.mxu0 0.0
    %1631 = vmatprep.subr.mxu0 0.0
    %1632 = vmatpush1.msra.mxu0 0.0
    %1633 = vmatprep.subr.mxu0 0.0
    %1634 = vmatpush1.msra.mxu0 0.0
    %1635 = vmatprep.subr.mxu0 0.0
    %1636 = vmatpush1.msra.mxu0 0.0
    %1637 = vmatprep.subr.mxu0 0.0
    %1638 = vmatpush1.msra.mxu0 0.0
    %1639 = vmatprep.subr.mxu0 0.0
    %1640 = vmatpush1.msra.mxu0 0.0
    %1641 = vmatprep.subr.mxu0 0.0
    %1642 = vmatpush1.msra.mxu0 0.0
    %1643 = vmatprep.subr.mxu0 0.0
    %1644 = vmatpush1.msra.mxu0 0.0
    %1645 = vmatprep.mubr.f32.mxu0 0.0
    %1646 = vmatmul.mubr.f32.gmra.mrb[0].mxu0 %v1579
    %v1647 = vpop.f32.mrb[0].mxu0
    %v1648 = vadd.f32 0.0, %v1647
    %v1649 = vpop.f32.mrb[0].mxu0
    %1650 = vdwg.mxu0
    %v1652 = vsel %vm437, %v1139, 0
    %1654 = vmatprep.subr.mxu0 0.0
    %1655 = vmatpush1.msra.mxu0 %v434
    %1656 = vmatprep.subr.mxu0 0.0
    %1657 = vmatpush1.msra.mxu0 0.0
    %1658 = vmatprep.subr.mxu0 0.0
    %1659 = vmatpush1.msra.mxu0 0.0
    %1660 = vmatprep.subr.mxu0 0.0
    %1661 = vmatpush1.msra.mxu0 0.0
    %1662 = vmatprep.subr.mxu0 0.0
    %1663 = vmatpush1.msra.mxu0 0.0
    %1664 = vmatprep.subr.mxu0 0.0
    %1665 = vmatpush1.msra.mxu0 0.0
    %1666 = vmatprep.subr.mxu0 0.0
    %1667 = vmatpush1.msra.mxu0 0.0
    %1668 = vmatprep.subr.mxu0 0.0
    %1669 = vmatpush1.msra.mxu0 0.0
    %1670 = vmatprep.subr.mxu0 0.0
    %1671 = vmatpush1.msra.mxu0 0.0
    %1672 = vmatprep.subr.mxu0 0.0
    %1673 = vmatpush1.msra.mxu0 0.0
    %1674 = vmatprep.subr.mxu0 0.0
    %1675 = vmatpush1.msra.mxu0 0.0
    %1676 = vmatprep.subr.mxu0 0.0
    %1677 = vmatpush1.msra.mxu0 0.0
    %1678 = vmatprep.subr.mxu0 0.0
    %1679 = vmatpush1.msra.mxu0 0.0
    %1680 = vmatprep.subr.mxu0 0.0
    %1681 = vmatpush1.msra.mxu0 0.0
    %1682 = vmatprep.subr.mxu0 0.0
    %1683 = vmatpush1.msra.mxu0 0.0
    %1684 = vmatprep.subr.mxu0 0.0
    %1685 = vmatpush1.msra.mxu0 0.0
    %1686 = vmatprep.subr.mxu0 0.0
    %1687 = vmatpush1.msra.mxu0 0.0
    %1688 = vmatprep.subr.mxu0 0.0
    %1689 = vmatpush1.msra.mxu0 0.0
    %1690 = vmatprep.subr.mxu0 0.0
    %1691 = vmatpush1.msra.mxu0 0.0
    %1692 = vmatprep.subr.mxu0 0.0
    %1693 = vmatpush1.msra.mxu0 0.0
    %1694 = vmatprep.subr.mxu0 0.0
    %1695 = vmatpush1.msra.mxu0 0.0
    %1696 = vmatprep.subr.mxu0 0.0
    %1697 = vmatpush1.msra.mxu0 0.0
    %1698 = vmatprep.subr.mxu0 0.0
    %1699 = vmatpush1.msra.mxu0 0.0
    %1700 = vmatprep.subr.mxu0 0.0
    %1701 = vmatpush1.msra.mxu0 0.0
    %1702 = vmatprep.subr.mxu0 0.0
    %1703 = vmatpush1.msra.mxu0 0.0
    %1704 = vmatprep.subr.mxu0 0.0
    %1705 = vmatpush1.msra.mxu0 0.0
    %1706 = vmatprep.subr.mxu0 0.0
    %1707 = vmatpush1.msra.mxu0 0.0
    %1708 = vmatprep.subr.mxu0 0.0
    %1709 = vmatpush1.msra.mxu0 0.0
    %1710 = vmatprep.subr.mxu0 0.0
    %1711 = vmatpush1.msra.mxu0 0.0
    %1712 = vmatprep.subr.mxu0 0.0
    %1713 = vmatpush1.msra.mxu0 0.0
    %1714 = vmatprep.subr.mxu0 0.0
    %1715 = vmatpush1.msra.mxu0 0.0
    %1716 = vmatprep.subr.mxu0 0.0
    %1717 = vmatpush1.msra.mxu0 0.0
    %1718 = vmatprep.mubr.f32.mxu0 0.0
    %1719 = vmatmul.mubr.f32.gmra.mrb[0].mxu0 %v1652
    %v1720 = vpop.f32.mrb[0].mxu0
    %v1721 = vadd.f32 0.0, %v1720
    %v1722 = vpop.f32.mrb[0].mxu0
    %1723 = vdwg.mxu0
    %v1724 = vld [vmem:[#allocation10] sm:$0xff]
    %v1725 = vld [vmem:[#allocation10 + $0x8] sm:$0xff]
    %v1726 = vld [vmem:[#allocation10 + $0x10] sm:$0xff]
    %v1727 = vld [vmem:[#allocation10 + $0x18] sm:$0xff]
    %v1729 = vsel %vm437, %v1283, 0
    %v1732 = vsel %vm437, %v1575, 0
    %1734 = vmatprep.subr.mxu0 0.0
    %1735 = vmatpush1.msra.mxu0 %v1725
    %1736 = vmatprep.subr.mxu0 0.0
    %1737 = vmatpush1.msra.mxu0 0.0
    %1738 = vmatprep.subr.mxu0 0.0
    %1739 = vmatpush1.msra.mxu0 0.0
    %1740 = vmatprep.subr.mxu0 0.0
    %1741 = vmatpush1.msra.mxu0 0.0
    %1742 = vmatprep.subr.mxu0 0.0
    %1743 = vmatpush1.msra.mxu0 0.0
    %1744 = vmatprep.subr.mxu0 0.0
    %1745 = vmatpush1.msra.mxu0 0.0
    %1746 = vmatprep.subr.mxu0 0.0
    %1747 = vmatpush1.msra.mxu0 0.0
    %1748 = vmatprep.subr.mxu0 0.0
    %1749 = vmatpush1.msra.mxu0 0.0
    %1750 = vmatprep.subr.mxu0 0.0
    %1751 = vmatpush1.msra.mxu0 0.0
    %1752 = vmatprep.subr.mxu0 0.0
    %1753 = vmatpush1.msra.mxu0 0.0
    %1754 = vmatprep.subr.mxu0 0.0
    %1755 = vmatpush1.msra.mxu0 0.0
    %1756 = vmatprep.subr.mxu0 0.0
    %1757 = vmatpush1.msra.mxu0 0.0
    %1758 = vmatprep.subr.mxu0 0.0
    %1759 = vmatpush1.msra.mxu0 0.0
    %1760 = vmatprep.subr.mxu0 0.0
    %1761 = vmatpush1.msra.mxu0 0.0
    %1762 = vmatprep.subr.mxu0 0.0
    %1763 = vmatpush1.msra.mxu0 0.0
    %1764 = vmatprep.subr.mxu0 0.0
    %1765 = vmatpush1.msra.mxu0 0.0
    %1766 = vmatprep.subr.mxu0 0.0
    %1767 = vmatpush1.msra.mxu0 0.0
    %1768 = vmatprep.subr.mxu0 0.0
    %1769 = vmatpush1.msra.mxu0 0.0
    %1770 = vmatprep.subr.mxu0 0.0
    %1771 = vmatpush1.msra.mxu0 0.0
    %1772 = vmatprep.subr.mxu0 0.0
    %1773 = vmatpush1.msra.mxu0 0.0
    %1774 = vmatprep.subr.mxu0 0.0
    %1775 = vmatpush1.msra.mxu0 0.0
    %1776 = vmatprep.subr.mxu0 0.0
    %1777 = vmatpush1.msra.mxu0 0.0
    %1778 = vmatprep.subr.mxu0 0.0
    %1779 = vmatpush1.msra.mxu0 0.0
    %1780 = vmatprep.subr.mxu0 0.0
    %1781 = vmatpush1.msra.mxu0 0.0
    %1782 = vmatprep.subr.mxu0 0.0
    %1783 = vmatpush1.msra.mxu0 0.0
    %1784 = vmatprep.subr.mxu0 0.0
    %1785 = vmatpush1.msra.mxu0 0.0
    %1786 = vmatprep.subr.mxu0 0.0
    %1787 = vmatpush1.msra.mxu0 0.0
    %1788 = vmatprep.subr.mxu0 0.0
    %1789 = vmatpush1.msra.mxu0 0.0
    %1790 = vmatprep.subr.mxu0 0.0
    %1791 = vmatpush1.msra.mxu0 0.0
    %1792 = vmatprep.subr.mxu0 0.0
    %1793 = vmatpush1.msra.mxu0 0.0
    %1794 = vmatprep.subr.mxu0 0.0
    %1795 = vmatpush1.msra.mxu0 0.0
    %1796 = vmatprep.subr.mxu0 0.0
    %1797 = vmatpush1.msra.mxu0 0.0
    %1798 = vmatprep.mubr.f32.mxu0 0.0
    %1799 = vmatmul.mubr.f32.gmra.mrb[0].mxu0 %v1729
    %v1800 = vpop.f32.mrb[0].mxu0
    %v1801 = vadd.f32 0.0, %v1800
    %v1802 = vpop.f32.mrb[0].mxu0
    %1803 = vmatprep.mubr.f32.mxu0 0.0
    %1804 = vmatmul.mubr.f32.gmra.mrb[0].mxu0 %v1732
    %v1805 = vpop.f32.mrb[0].mxu0
    %v1806 = vadd.f32 0.0, %v1805
    %v1807 = vpop.f32.mrb[0].mxu0
    %1808 = vdwg.mxu0
    %v1810 = vsel %vm437, %v1210, 0
    %v1813 = vsel %vm437, %v1502, 0
    %1815 = vmatprep.subr.mxu0 0.0
    %1816 = vmatpush1.msra.mxu0 %v1724
    %1817 = vmatprep.subr.mxu0 0.0
    %1818 = vmatpush1.msra.mxu0 0.0
    %1819 = vmatprep.subr.mxu0 0.0
    %1820 = vmatpush1.msra.mxu0 0.0
    %1821 = vmatprep.subr.mxu0 0.0
    %1822 = vmatpush1.msra.mxu0 0.0
    %1823 = vmatprep.subr.mxu0 0.0
    %1824 = vmatpush1.msra.mxu0 0.0
    %1825 = vmatprep.subr.mxu0 0.0
    %1826 = vmatpush1.msra.mxu0 0.0
    %1827 = vmatprep.subr.mxu0 0.0
    %1828 = vmatpush1.msra.mxu0 0.0
    %1829 = vmatprep.subr.mxu0 0.0
    %1830 = vmatpush1.msra.mxu0 0.0
    %1831 = vmatprep.subr.mxu0 0.0
    %1832 = vmatpush1.msra.mxu0 0.0
    %1833 = vmatprep.subr.mxu0 0.0
    %1834 = vmatpush1.msra.mxu0 0.0
    %1835 = vmatprep.subr.mxu0 0.0
    %1836 = vmatpush1.msra.mxu0 0.0
    %1837 = vmatprep.subr.mxu0 0.0
    %1838 = vmatpush1.msra.mxu0 0.0
    %1839 = vmatprep.subr.mxu0 0.0
    %1840 = vmatpush1.msra.mxu0 0.0
    %1841 = vmatprep.subr.mxu0 0.0
    %1842 = vmatpush1.msra.mxu0 0.0
    %1843 = vmatprep.subr.mxu0 0.0
    %1844 = vmatpush1.msra.mxu0 0.0
    %1845 = vmatprep.subr.mxu0 0.0
    %1846 = vmatpush1.msra.mxu0 0.0
    %1847 = vmatprep.subr.mxu0 0.0
    %1848 = vmatpush1.msra.mxu0 0.0
    %1849 = vmatprep.subr.mxu0 0.0
    %1850 = vmatpush1.msra.mxu0 0.0
    %1851 = vmatprep.subr.mxu0 0.0
    %1852 = vmatpush1.msra.mxu0 0.0
    %1853 = vmatprep.subr.mxu0 0.0
    %1854 = vmatpush1.msra.mxu0 0.0
    %1855 = vmatprep.subr.mxu0 0.0
    %1856 = vmatpush1.msra.mxu0 0.0
    %1857 = vmatprep.subr.mxu0 0.0
    %1858 = vmatpush1.msra.mxu0 0.0
    %1859 = vmatprep.subr.mxu0 0.0
    %1860 = vmatpush1.msra.mxu0 0.0
    %1861 = vmatprep.subr.mxu0 0.0
    %1862 = vmatpush1.msra.mxu0 0.0
    %1863 = vmatprep.subr.mxu0 0.0
    %1864 = vmatpush1.msra.mxu0 0.0
    %1865 = vmatprep.subr.mxu0 0.0
    %1866 = vmatpush1.msra.mxu0 0.0
    %1867 = vmatprep.subr.mxu0 0.0
    %1868 = vmatpush1.msra.mxu0 0.0
    %1869 = vmatprep.subr.mxu0 0.0
    %1870 = vmatpush1.msra.mxu0 0.0
    %1871 = vmatprep.subr.mxu0 0.0
    %1872 = vmatpush1.msra.mxu0 0.0
    %1873 = vmatprep.subr.mxu0 0.0
    %1874 = vmatpush1.msra.mxu0 0.0
    %1875 = vmatprep.subr.mxu0 0.0
    %1876 = vmatpush1.msra.mxu0 0.0
    %1877 = vmatprep.subr.mxu0 0.0
    %1878 = vmatpush1.msra.mxu0 0.0
    %1879 = vmatprep.mubr.f32.mxu0 0.0
    %1880 = vmatmul.mubr.f32.gmra.mrb[0].mxu0 %v1810
    %v1881 = vpop.f32.mrb[0].mxu0
    %v1882 = vadd.f32 %v1801, %v1881
    %v1883 = vpop.f32.mrb[0].mxu0
    %1884 = vmatprep.mubr.f32.mxu0 0.0
    %1885 = vmatmul.mubr.f32.gmra.mrb[0].mxu0 %v1813
    %v1886 = vpop.f32.mrb[0].mxu0
    %v1887 = vadd.f32 %v1806, %v1886
    %v1888 = vpop.f32.mrb[0].mxu0
    %1889 = vdwg.mxu0
    %v1891 = vsel %vm437, %v1356, 0
    %v1894 = vsel %vm437, %v1648, 0
    %1896 = vmatprep.subr.mxu0 0.0
    %1897 = vmatpush1.msra.mxu0 %v1726
    %1898 = vmatprep.subr.mxu0 0.0
    %1899 = vmatpush1.msra.mxu0 0.0
    %1900 = vmatprep.subr.mxu0 0.0
    %1901 = vmatpush1.msra.mxu0 0.0
    %1902 = vmatprep.subr.mxu0 0.0
    %1903 = vmatpush1.msra.mxu0 0.0
    %1904 = vmatprep.subr.mxu0 0.0
    %1905 = vmatpush1.msra.mxu0 0.0
    %1906 = vmatprep.subr.mxu0 0.0
    %1907 = vmatpush1.msra.mxu0 0.0
    %1908 = vmatprep.subr.mxu0 0.0
    %1909 = vmatpush1.msra.mxu0 0.0
    %1910 = vmatprep.subr.mxu0 0.0
    %1911 = vmatpush1.msra.mxu0 0.0
    %1912 = vmatprep.subr.mxu0 0.0
    %1913 = vmatpush1.msra.mxu0 0.0
    %1914 = vmatprep.subr.mxu0 0.0
    %1915 = vmatpush1.msra.mxu0 0.0
    %1916 = vmatprep.subr.mxu0 0.0
    %1917 = vmatpush1.msra.mxu0 0.0
    %1918 = vmatprep.subr.mxu0 0.0
    %1919 = vmatpush1.msra.mxu0 0.0
    %1920 = vmatprep.subr.mxu0 0.0
    %1921 = vmatpush1.msra.mxu0 0.0
    %1922 = vmatprep.subr.mxu0 0.0
    %1923 = vmatpush1.msra.mxu0 0.0
    %1924 = vmatprep.subr.mxu0 0.0
    %1925 = vmatpush1.msra.mxu0 0.0
    %1926 = vmatprep.subr.mxu0 0.0
    %1927 = vmatpush1.msra.mxu0 0.0
    %1928 = vmatprep.subr.mxu0 0.0
    %1929 = vmatpush1.msra.mxu0 0.0
    %1930 = vmatprep.subr.mxu0 0.0
    %1931 = vmatpush1.msra.mxu0 0.0
    %1932 = vmatprep.subr.mxu0 0.0
    %1933 = vmatpush1.msra.mxu0 0.0
    %1934 = vmatprep.subr.mxu0 0.0
    %1935 = vmatpush1.msra.mxu0 0.0
    %1936 = vmatprep.subr.mxu0 0.0
    %1937 = vmatpush1.msra.mxu0 0.0
    %1938 = vmatprep.subr.mxu0 0.0
    %1939 = vmatpush1.msra.mxu0 0.0
    %1940 = vmatprep.subr.mxu0 0.0
    %1941 = vmatpush1.msra.mxu0 0.0
    %1942 = vmatprep.subr.mxu0 0.0
    %1943 = vmatpush1.msra.mxu0 0.0
    %1944 = vmatprep.subr.mxu0 0.0
    %1945 = vmatpush1.msra.mxu0 0.0
    %1946 = vmatprep.subr.mxu0 0.0
    %1947 = vmatpush1.msra.mxu0 0.0
    %1948 = vmatprep.subr.mxu0 0.0
    %1949 = vmatpush1.msra.mxu0 0.0
    %1950 = vmatprep.subr.mxu0 0.0
    %1951 = vmatpush1.msra.mxu0 0.0
    %1952 = vmatprep.subr.mxu0 0.0
    %1953 = vmatpush1.msra.mxu0 0.0
    %1954 = vmatprep.subr.mxu0 0.0
    %1955 = vmatpush1.msra.mxu0 0.0
    %1956 = vmatprep.subr.mxu0 0.0
    %1957 = vmatpush1.msra.mxu0 0.0
    %1958 = vmatprep.subr.mxu0 0.0
    %1959 = vmatpush1.msra.mxu0 0.0
    %1960 = vmatprep.mubr.f32.mxu0 0.0
    %1961 = vmatmul.mubr.f32.gmra.mrb[0].mxu0 %v1891
    %v1962 = vpop.f32.mrb[0].mxu0
    %v1963 = vadd.f32 0.0, %v1962
    %v1964 = vpop.f32.mrb[0].mxu0
    %1965 = vmatprep.mubr.f32.mxu0 0.0
    %1966 = vmatmul.mubr.f32.gmra.mrb[0].mxu0 %v1894
    %v1967 = vpop.f32.mrb[0].mxu0
    %v1968 = vadd.f32 0.0, %v1967
    %v1969 = vpop.f32.mrb[0].mxu0
    %1970 = vdwg.mxu0
    %v1971 = vadd.f32 %v1882, %v1963
    %v1972 = vadd.f32 %v1887, %v1968
    %v1974 = vsel %vm437, %v1429, 0
    %v1977 = vsel %vm437, %v1721, 0
    %1979 = vmatprep.subr.mxu0 0.0
    %1980 = vmatpush1.msra.mxu0 %v1727
    %1981 = vmatprep.subr.mxu0 0.0
    %1982 = vmatpush1.msra.mxu0 0.0
    %1983 = vmatprep.subr.mxu0 0.0
    %1984 = vmatpush1.msra.mxu0 0.0
    %1985 = vmatprep.subr.mxu0 0.0
    %1986 = vmatpush1.msra.mxu0 0.0
    %1987 = vmatprep.subr.mxu0 0.0
    %1988 = vmatpush1.msra.mxu0 0.0
    %1989 = vmatprep.subr.mxu0 0.0
    %1990 = vmatpush1.msra.mxu0 0.0
    %1991 = vmatprep.subr.mxu0 0.0
    %1992 = vmatpush1.msra.mxu0 0.0
    %1993 = vmatprep.subr.mxu0 0.0
    %1994 = vmatpush1.msra.mxu0 0.0
    %1995 = vmatprep.subr.mxu0 0.0
    %1996 = vmatpush1.msra.mxu0 0.0
    %1997 = vmatprep.subr.mxu0 0.0
    %1998 = vmatpush1.msra.mxu0 0.0
    %1999 = vmatprep.subr.mxu0 0.0
    %2000 = vmatpush1.msra.mxu0 0.0
    %2001 = vmatprep.subr.mxu0 0.0
    %2002 = vmatpush1.msra.mxu0 0.0
    %2003 = vmatprep.subr.mxu0 0.0
    %2004 = vmatpush1.msra.mxu0 0.0
    %2005 = vmatprep.subr.mxu0 0.0
    %2006 = vmatpush1.msra.mxu0 0.0
    %2007 = vmatprep.subr.mxu0 0.0
    %2008 = vmatpush1.msra.mxu0 0.0
    %2009 = vmatprep.subr.mxu0 0.0
    %2010 = vmatpush1.msra.mxu0 0.0
    %2011 = vmatprep.subr.mxu0 0.0
    %2012 = vmatpush1.msra.mxu0 0.0
    %2013 = vmatprep.subr.mxu0 0.0
    %2014 = vmatpush1.msra.mxu0 0.0
    %2015 = vmatprep.subr.mxu0 0.0
    %2016 = vmatpush1.msra.mxu0 0.0
    %2017 = vmatprep.subr.mxu0 0.0
    %2018 = vmatpush1.msra.mxu0 0.0
    %2019 = vmatprep.subr.mxu0 0.0
    %2020 = vmatpush1.msra.mxu0 0.0
    %2021 = vmatprep.subr.mxu0 0.0
    %2022 = vmatpush1.msra.mxu0 0.0
    %2023 = vmatprep.subr.mxu0 0.0
    %2024 = vmatpush1.msra.mxu0 0.0
    %2025 = vmatprep.subr.mxu0 0.0
    %2026 = vmatpush1.msra.mxu0 0.0
    %2027 = vmatprep.subr.mxu0 0.0
    %2028 = vmatpush1.msra.mxu0 0.0
    %2029 = vmatprep.subr.mxu0 0.0
    %2030 = vmatpush1.msra.mxu0 0.0
    %2031 = vmatprep.subr.mxu0 0.0
    %2032 = vmatpush1.msra.mxu0 0.0
    %2033 = vmatprep.subr.mxu0 0.0
    %2034 = vmatpush1.msra.mxu0 0.0
    %2035 = vmatprep.subr.mxu0 0.0
    %2036 = vmatpush1.msra.mxu0 0.0
    %2037 = vmatprep.subr.mxu0 0.0
    %2038 = vmatpush1.msra.mxu0 0.0
    %2039 = vmatprep.subr.mxu0 0.0
    %2040 = vmatpush1.msra.mxu0 0.0
    %2041 = vmatprep.subr.mxu0 0.0
    %2042 = vmatpush1.msra.mxu0 0.0
    %2043 = vmatprep.mubr.f32.mxu0 0.0
    %2044 = vmatmul.mubr.f32.gmra.mrb[0].mxu0 %v1974
    %v2045 = vpop.f32.mrb[0].mxu0
    %v2046 = vadd.f32 0.0, %v2045
    %v2047 = vpop.f32.mrb[0].mxu0
    %2048 = vmatprep.mubr.f32.mxu0 0.0
    %2049 = vmatmul.mubr.f32.gmra.mrb[0].mxu0 %v1977
    %v2050 = vpop.f32.mrb[0].mxu0
    %v2051 = vadd.f32 0.0, %v2050
    %v2052 = vpop.f32.mrb[0].mxu0
    %2053 = vdwg.mxu0
    %v2054 = vadd.f32 %v1971, %v2046
    %v2055 = vadd.f32 %v1972, %v2051
    %v2056 = vld [vmem:[%s7] sm:$0x1]
    %v2058 = vlaneseq
    %v2059 = vshrl.u32 %v2058, 7
    %v2060 = vsub.s32 0, %v2059
    %v2061 = vrot.slane %v2056, %v2060
    %v2063 = vadd.f32 %v2054, %v2061
    %v2064 = vadd.f32 %v2055, %v2061
    %2065 = vst.msk [vmem:[#allocation11] sm:$0xff] %vm117, %v2063
    %2066 = vst.msk [vmem:[#allocation11 + $0x8] sm:$0xff] %vm117, %v2064
    // Predicated region
    $region54: #{tpu_custom_call.1} parent=1 // pred_check
      _
    $region55: #{tpu_custom_call.1} parent=1 // pred_check_branch
      %2068 = sbr.rel (0) target = $region57
    $region56: #{tpu_custom_call.1} parent=1 // pred_region
      %s2070 = ssub.s32 256, 256
      %2071 = vsyncadd [#allocation4], %s2070
      %s2072 = sshll.u32 [#allocation11], 4
      %s2073 = int_to_ptr.vmem [resolvable:$true] %s2072
      %2078 = dma.vmem_to_hbm [thread:$0]  %s2073, 256, %s8, [#allocation4], 128, 128, 8
    $region57: #{tpu_custom_call.1} parent=1 // pred_fallthru
      _
    // Predicated region
    $region58: #{tpu_custom_call.1} parent=1 // pred_check
      _
    $region59: #{tpu_custom_call.1} parent=1 // pred_check_branch
      %2080 = sbr.rel (0) target = $region61
    $region60: #{tpu_custom_call.1} parent=1 // pred_region
      %2081 = dma.done [#allocation4], 256
    $region61: #{tpu_custom_call.1} parent=1 // pred_fallthru
      _
    %2082 = vsyncpa [#allocation3], 1
    %2083 = vsyncpa [#allocation6], 1
    %2084 = vsyncpa [#allocation9], 1
    %2085 = vsyncpa [#allocation4], 1

</llo_original>
